<compile_context>
chip_gen: v5e
topology: v5e:2x2
jax: 0.10.0
libtpu: 0.0.40
codegen_flags: <defaults>
</compile_context>

<pallas_src>
import functools

import jax
import jax.numpy as jnp
import numpy as np
from jax import lax
from jax.experimental import pallas as pl
from jax.experimental.pallas import tpu as pltpu


def conv_lrelu_kernel(x_ref, w_ref, b_ref, m_ref, o_ref, xcat_ref, *, width, lead):
    # x_ref   : (bt, C, S)   NCHW input block, S = H*W (lane-dense)
    # w_ref   : (3, C, 3C)   per-dy weights, dx taps fused into K = 3*C
    # b_ref   : (C, 1)       bias (f32)
    # m_ref   : (1, S-1)     0/1 border mask (0 where idx % W == W-1)
    # o_ref   : (bt, C, S)   output block (lane-dense)
    # xcat_ref: (3C, L)      dx-band scratch, L = 2*LEAD + S
    bt, C, S = x_ref.shape
    W = width
    LEAD = lead

    # Zero only the thin halo column slabs (the H-padding rows of every band);
    # the band interiors are fully rewritten below -> no full-slab zero fill,
    # and it is done per grid step so it stays correct under megacore sharding.
    zcol = jnp.zeros((3 * C, W + 1), xcat_ref.dtype)
    xcat_ref[:, LEAD - W:LEAD + 1] = zcol
    xcat_ref[:, LEAD + S - 1:LEAD + S + W] = zcol

    mk = m_ref[...]                                     # (1, S-1)
    bias = jnp.broadcast_to(b_ref[...], (C, S))         # hoisted f32 broadcast

    for i in range(bt):                                 # bt is small & static
        xv = x_ref[i]                                   # (C, S)

        # Build the three dx column bands of the zero-padded image:
        #   band dx=1 : the image itself (128-aligned store; pad rows = halo)
        #   band dx=0 : columns shifted right by 1, w==0   column zeroed
        #   band dx=2 : columns shifted left  by 1, w==W-1 column zeroed
        xcat_ref[C:2 * C, LEAD:LEAD + S] = xv
        xcat_ref[0:C, LEAD + 1:LEAD + S] = xv[:, 0:S - 1] * mk
        xcat_ref[2 * C:3 * C, LEAD:LEAD + S - 1] = xv[:, 1:S] * mk

        # 3 MXU matmuls, K = 3*C, spatial on the wide N/result axis.
        acc = bias
        for dy in range(3):
            start = LEAD + (dy - 1) * W
            p = xcat_ref[:, start:start + S]            # (3C, S)
            acc = acc + jnp.dot(w_ref[dy], p,
                                preferred_element_type=jnp.float32)

        # LeakyReLU(0.1) in f32, then cast + lane-dense store.
        o_ref[i] = jnp.maximum(acc, 0.1 * acc).astype(o_ref.dtype)


def _vmem_capacity_bytes():
    try:
        return int(pltpu.get_tpu_info().vmem_capacity_bytes)
    except Exception:
        return 64 * 1024 * 1024


def _pick_block_batch(B, bytes_per_image, vmem_cap):
    """Largest divisor of B that (a) keeps the grid length >= 2 when B >= 2
    (v7x megacore + pipeline overlap) and (b) keeps the per-step input block
    within a conservative slice of VMEM."""
    budget = min(4 * 1024 * 1024, vmem_cap // 16)
    cap_bt = max(1, B // 2)
    bt = 1
    for d in range(1, B + 1):
        if B % d == 0 and d <= cap_bt and d * bytes_per_image <= budget:
            bt = d
    return bt


def conv_blocks_forward(x_nchw, weight_oihw, bias, *, block_batch=None):
    """ConvBlocks forward. NCHW in / NCHW out (PyTorch layout, no transposes).

    x_nchw      : (B, C, H, W)  activations (f32 or bf16)
    weight_oihw : (C, C, 3, 3)  PyTorch OIHW weights
    bias        : (C,)
    returns     : (B, C, H, W), dtype of x_nchw
    """
    B, C, H, W = x_nchw.shape
    assert weight_oihw.shape == (C, C, 3, 3)
    S = H * W
    LEAD = ((W + 127) // 128) * 128          # 128-aligned slot for the image rows
    L = 2 * LEAD + S

    x2 = x_nchw.reshape(B, C, S)             # free, contiguous reshape
    # (O,I,dy,dx) -> (dy, O, dx, I) -> (dy, O, dx*C + ci): dx fused into K = 3*C.
    w_k = jnp.transpose(weight_oihw, (2, 0, 3, 1)).reshape(3, C, 3 * C)
    w_k = w_k.astype(x_nchw.dtype)
    b2 = bias.reshape(C, 1).astype(jnp.float32)

    # 0/1 mask that zeroes the wrapped-around border column of the shifted bands.
    idx = np.arange(S - 1)
    mask = jnp.asarray((idx % W != W - 1).astype(np.float32).reshape(1, S - 1),
                       dtype=x_nchw.dtype)

    itemsize = jnp.dtype(x_nchw.dtype).itemsize
    vmem_cap = _vmem_capacity_bytes()
    bt = block_batch or _pick_block_batch(B, C * S * itemsize, vmem_cap)
    assert B % bt == 0

    # Generous but safe scoped-VMEM limit: double-buffered in/out blocks +
    # xcat scratch + weights + f32 accumulator / operand-relayout slack.
    need = (4 * bt * C * S * itemsize
            + 3 * C * L * itemsize
            + 9 * C * C * itemsize
            + 4 * C * S * 4)
    vmem_limit = int(max(32 * 1024 * 1024,
                         min(int(1.5 * need), int(0.7 * vmem_cap))))

    kernel = functools.partial(conv_lrelu_kernel, width=W, lead=LEAD)

    out = pl.pallas_call(
        kernel,
        out_shape=jax.ShapeDtypeStruct((B, C, S), x_nchw.dtype),
        grid_spec=pltpu.PrefetchScalarGridSpec(
            num_scalar_prefetch=0,
            grid=(B // bt,),
            in_specs=[
                pl.BlockSpec((bt, C, S), lambda b: (b, 0, 0)),
                pl.BlockSpec((3, C, 3 * C), lambda b: (0, 0, 0)),
                pl.BlockSpec((C, 1), lambda b: (0, 0)),
                pl.BlockSpec((1, S - 1), lambda b: (0, 0)),
            ],
            out_specs=pl.BlockSpec((bt, C, S), lambda b: (b, 0, 0)),
            scratch_shapes=[
                pltpu.VMEM((3 * C, L), x_nchw.dtype),
            ],
        ),
        compiler_params=pltpu.CompilerParams(
            dimension_semantics=("parallel",),
            vmem_limit_bytes=vmem_limit),
    )(x2, w_k, b2, mask)

    return out.reshape(B, C, H, W)


def init_params(nf, key):
    """Deterministic init mirroring initialize_weights([conv1], 0.1):
    kaiming_normal_(a=0, mode='fan_in') -> std = sqrt(2 / fan_in), then *0.1.
    Bias is zeroed (the forward itself supports any bias)."""
    fan_in = nf * 3 * 3
    std = np.sqrt(2.0 / fan_in)
    w = jax.random.normal(key, (nf, nf, 3, 3), dtype=jnp.float32) * std * 0.1
    b = jnp.zeros((nf,), dtype=jnp.float32)
    return w, b


def reference_forward(x_nchw, weight_oihw, bias):
    y = lax.conv_general_dilated(
        x_nchw.astype(jnp.float32), weight_oihw.astype(jnp.float32),
        window_strides=(1, 1),
        padding=((1, 1), (1, 1)),
        dimension_numbers=("NCHW", "OIHW", "NCHW"),
        preferred_element_type=jnp.float32,
    )
    y = y + bias.reshape(1, -1, 1, 1).astype(jnp.float32)
    return jnp.where(y >= 0, y, 0.1 * y)


if __name__ == "__main__":
    key = jax.random.PRNGKey(0)
    k_w, k_b, k_x = jax.random.split(key, 3)

    nf = 64          # default channel count of ConvBlocks
    B, H, W = 2, 16, 16

    weight, _zero_bias = init_params(nf, k_w)
    # Use a nonzero bias in the test so the bias path is actually exercised.
    bias = 0.1 * jax.random.normal(k_b, (nf,), dtype=jnp.float32)
    x = jax.random.normal(k_x, (B, nf, H, W), dtype=jnp.float32)

    # --- f32 path: tight correctness check vs. the XLA conv reference ------
    out_f32 = jax.block_until_ready(conv_blocks_forward(x, weight, bias))
    ref_f32 = jax.block_until_ready(reference_forward(x, weight, bias))
    assert out_f32.shape == (B, nf, H, W)
    np.testing.assert_allclose(np.asarray(out_f32), np.asarray(ref_f32),
                               rtol=1e-4, atol=1e-4)

    # --- bf16-in-HBM path (recommended deployment dtype: ~2x fewer bytes) --
    x_bf = x.astype(jnp.bfloat16)
    w_bf = weight.astype(jnp.bfloat16)
    out_bf = jax.block_until_ready(conv_blocks_forward(x_bf, w_bf, bias))
    ref_bf = jax.block_until_ready(
        reference_forward(x_bf.astype(jnp.float32),
                          w_bf.astype(jnp.float32), bias))
    np.testing.assert_allclose(np.asarray(out_bf, dtype=np.float32),
                               np.asarray(ref_bf), rtol=2e-2, atol=2e-2)

    print("KERNEL_OK")
</pallas_src>

<mosaic_0001>
module attributes {stable_mosaic.version = 11 : i64} {
  func.func @conv_lrelu_kernel(%arg0: i32, %arg1: memref<1x64x256xf32, #tpu.memory_space<vmem>>, %arg2: memref<3x64x192xf32, #tpu.memory_space<vmem>>, %arg3: memref<64x1xf32, #tpu.memory_space<vmem>>, %arg4: memref<1x255xf32, #tpu.memory_space<vmem>>, %arg5: memref<1x64x256xf32, #tpu.memory_space<vmem>>, %arg6: memref<192x512xf32, #tpu.memory_space<vmem>>) attributes {dimension_semantics = [#tpu.dimension_semantics<parallel>], iteration_bounds = array<i64: 2>, scalar_prefetch = 0 : i64, scratch_operands = 1 : i64, tpu.core_type = #tpu.core_type<tc>, window_params = [{transform_indices = @transform_0, window_bounds = array<i64: 1, 64, 256>}, {pipeline_mode = #tpu.pipeline_mode<synchronous>, transform_indices = @transform_1, window_bounds = array<i64: 3, 64, 192>}, {pipeline_mode = #tpu.pipeline_mode<synchronous>, transform_indices = @transform_2, window_bounds = array<i64: 64, 1>}, {pipeline_mode = #tpu.pipeline_mode<synchronous>, transform_indices = @transform_3, window_bounds = array<i64: 1, 255>}, {transform_indices = @transform_4, window_bounds = array<i64: 1, 64, 256>}]} {
    %cst = arith.constant 0.000000e+00 : f32
    %0 = vector.broadcast %cst : f32 to vector<192x17xf32>
    %c0 = arith.constant 0 : index
    %c112 = arith.constant 112 : index
    %1 = vector.load %arg6[%c0, %c112] : memref<192x512xf32, #tpu.memory_space<vmem>>, vector<192x17xf32>
    tpu.vector_store %arg6[%c0, %c112], %0 {strides = array<i32>} : memref<192x512xf32, #tpu.memory_space<vmem>>, vector<192x17xf32>,
    %c0_0 = arith.constant 0 : index
    %c383 = arith.constant 383 : index
    %2 = vector.load %arg6[%c0_0, %c383] : memref<192x512xf32, #tpu.memory_space<vmem>>, vector<192x17xf32>
    tpu.vector_store %arg6[%c0_0, %c383], %0 {strides = array<i32>} : memref<192x512xf32, #tpu.memory_space<vmem>>, vector<192x17xf32>,
    %c0_1 = arith.constant 0 : index
    %c0_2 = arith.constant 0 : index
    %3 = vector.load %arg4[%c0_1, %c0_2] : memref<1x255xf32, #tpu.memory_space<vmem>>, vector<1x255xf32>
    %c0_3 = arith.constant 0 : index
    %c0_4 = arith.constant 0 : index
    %4 = vector.load %arg3[%c0_3, %c0_4] : memref<64x1xf32, #tpu.memory_space<vmem>>, vector<64x1xf32>
    %5 = vector.shape_cast %4 : vector<64x1xf32> to vector<64x1xf32>
    %6 = vector.broadcast %5 : vector<64x1xf32> to vector<64x256xf32>
    %c0_5 = arith.constant 0 : index
    %c0_6 = arith.constant 0 : index
    %c0_7 = arith.constant 0 : index
    %7 = vector.load %arg1[%c0_5, %c0_6, %c0_7] : memref<1x64x256xf32, #tpu.memory_space<vmem>>, vector<1x64x256xf32>
    %8 = vector.shape_cast %7 : vector<1x64x256xf32> to vector<64x256xf32>
    %c64 = arith.constant 64 : index
    %c128 = arith.constant 128 : index
    %9 = vector.load %arg6[%c64, %c128] : memref<192x512xf32, #tpu.memory_space<vmem>>, vector<64x256xf32>
    tpu.vector_store %arg6[%c64, %c128], %8 {strides = array<i32>} : memref<192x512xf32, #tpu.memory_space<vmem>>, vector<64x256xf32>,
    %10 = vector.extract_strided_slice %8 {offsets = [0, 0], sizes = [64, 255], strides = [1, 1]} : vector<64x256xf32> to vector<64x255xf32>
    %11 = vector.broadcast %3 : vector<1x255xf32> to vector<64x255xf32>
    %12 = arith.mulf %10, %11 : vector<64x255xf32>
    %c0_8 = arith.constant 0 : index
    %c129 = arith.constant 129 : index
    %13 = vector.load %arg6[%c0_8, %c129] : memref<192x512xf32, #tpu.memory_space<vmem>>, vector<64x255xf32>
    tpu.vector_store %arg6[%c0_8, %c129], %12 {strides = array<i32>} : memref<192x512xf32, #tpu.memory_space<vmem>>, vector<64x255xf32>,
    %14 = vector.extract_strided_slice %8 {offsets = [0, 1], sizes = [64, 255], strides = [1, 1]} : vector<64x256xf32> to vector<64x255xf32>
    %15 = vector.broadcast %3 : vector<1x255xf32> to vector<64x255xf32>
    %16 = arith.mulf %14, %15 : vector<64x255xf32>
    %c128_9 = arith.constant 128 : index
    %c128_10 = arith.constant 128 : index
    %17 = vector.load %arg6[%c128_9, %c128_10] : memref<192x512xf32, #tpu.memory_space<vmem>>, vector<64x255xf32>
    tpu.vector_store %arg6[%c128_9, %c128_10], %16 {strides = array<i32>} : memref<192x512xf32, #tpu.memory_space<vmem>>, vector<64x255xf32>,
    %c0_11 = arith.constant 0 : index
    %c112_12 = arith.constant 112 : index
    %18 = vector.load %arg6[%c0_11, %c112_12] : memref<192x512xf32, #tpu.memory_space<vmem>>, vector<192x256xf32>
    %c0_13 = arith.constant 0 : index
    %c0_14 = arith.constant 0 : index
    %c0_15 = arith.constant 0 : index
    %19 = vector.load %arg2[%c0_13, %c0_14, %c0_15] : memref<3x64x192xf32, #tpu.memory_space<vmem>>, vector<1x64x192xf32>
    %20 = vector.shape_cast %19 : vector<1x64x192xf32> to vector<64x192xf32>
    %cst_16 = arith.constant dense<0.000000e+00> : vector<64x256xf32>
    %21 = tpu.matmul %20, %18, %cst_16 {dimension_numbers = #tpu.dot_dimension_numbers<[1], [0], [0], [1], [0, 0, 1, 1], [], []>} : vector<64x192xf32>, vector<192x256xf32>, vector<64x256xf32> -> vector<64x256xf32>
    %22 = arith.addf %6, %21 : vector<64x256xf32>
    %c0_17 = arith.constant 0 : index
    %c128_18 = arith.constant 128 : index
    %23 = vector.load %arg6[%c0_17, %c128_18] : memref<192x512xf32, #tpu.memory_space<vmem>>, vector<192x256xf32>
    %c1 = arith.constant 1 : index
    %c0_19 = arith.constant 0 : index
    %c0_20 = arith.constant 0 : index
    %24 = vector.load %arg2[%c1, %c0_19, %c0_20] : memref<3x64x192xf32, #tpu.memory_space<vmem>>, vector<1x64x192xf32>
    %25 = vector.shape_cast %24 : vector<1x64x192xf32> to vector<64x192xf32>
    %cst_21 = arith.constant dense<0.000000e+00> : vector<64x256xf32>
    %26 = tpu.matmul %25, %23, %cst_21 {dimension_numbers = #tpu.dot_dimension_numbers<[1], [0], [0], [1], [0, 0, 1, 1], [], []>} : vector<64x192xf32>, vector<192x256xf32>, vector<64x256xf32> -> vector<64x256xf32>
    %27 = arith.addf %22, %26 : vector<64x256xf32>
    %c0_22 = arith.constant 0 : index
    %c144 = arith.constant 144 : index
    %28 = vector.load %arg6[%c0_22, %c144] : memref<192x512xf32, #tpu.memory_space<vmem>>, vector<192x256xf32>
    %c2 = arith.constant 2 : index
    %c0_23 = arith.constant 0 : index
    %c0_24 = arith.constant 0 : index
    %29 = vector.load %arg2[%c2, %c0_23, %c0_24] : memref<3x64x192xf32, #tpu.memory_space<vmem>>, vector<1x64x192xf32>
    %30 = vector.shape_cast %29 : vector<1x64x192xf32> to vector<64x192xf32>
    %cst_25 = arith.constant dense<0.000000e+00> : vector<64x256xf32>
    %31 = tpu.matmul %30, %28, %cst_25 {dimension_numbers = #tpu.dot_dimension_numbers<[1], [0], [0], [1], [0, 0, 1, 1], [], []>} : vector<64x192xf32>, vector<192x256xf32>, vector<64x256xf32> -> vector<64x256xf32>
    %32 = arith.addf %27, %31 : vector<64x256xf32>
    %cst_26 = arith.constant 1.000000e-01 : f32
    %33 = vector.broadcast %cst_26 : f32 to vector<64x256xf32>
    %34 = arith.mulf %33, %32 : vector<64x256xf32>
    %35 = arith.maximumf %32, %34 : vector<64x256xf32>
    %c0_27 = arith.constant 0 : index
    %c0_28 = arith.constant 0 : index
    %c0_29 = arith.constant 0 : index
    %36 = vector.load %arg5[%c0_27, %c0_28, %c0_29] : memref<1x64x256xf32, #tpu.memory_space<vmem>>, vector<1x64x256xf32>
    %37 = vector.shape_cast %36 : vector<1x64x256xf32> to vector<64x256xf32>
    %38 = vector.shape_cast %35 : vector<64x256xf32> to vector<1x64x256xf32>
    tpu.vector_store %arg5[%c0_27, %c0_28, %c0_29], %38 {strides = array<i32>} : memref<1x64x256xf32, #tpu.memory_space<vmem>>, vector<1x64x256xf32>,
    return
  }
  func.func @transform_0(%arg0: i32) -> (i32, i32, i32) {
    %c0_i32 = arith.constant 0 : i32
    %c0_i32_0 = arith.constant 0 : i32
    %c0_i32_1 = arith.constant 0 : i32
    return %arg0, %c0_i32, %c0_i32_0 : i32, i32, i32
  }
  func.func @transform_1(%arg0: i32) -> (i32, i32, i32) {
    %c0_i32 = arith.constant 0 : i32
    %c0_i32_0 = arith.constant 0 : i32
    %c0_i32_1 = arith.constant 0 : i32
    %c0_i32_2 = arith.constant 0 : i32
    return %c0_i32, %c0_i32_0, %c0_i32_1 : i32, i32, i32
  }
  func.func @transform_2(%arg0: i32) -> (i32, i32) {
    %c0_i32 = arith.constant 0 : i32
    %c0_i32_0 = arith.constant 0 : i32
    %c0_i32_1 = arith.constant 0 : i32
    return %c0_i32, %c0_i32_0 : i32, i32
  }
  func.func @transform_3(%arg0: i32) -> (i32, i32) {
    %c0_i32 = arith.constant 0 : i32
    %c0_i32_0 = arith.constant 0 : i32
    %c0_i32_1 = arith.constant 0 : i32
    return %c0_i32, %c0_i32_0 : i32, i32
  }
  func.func @transform_4(%arg0: i32) -> (i32, i32, i32) {
    %c0_i32 = arith.constant 0 : i32
    %c0_i32_0 = arith.constant 0 : i32
    %c0_i32_1 = arith.constant 0 : i32
    return %arg0, %c0_i32, %c0_i32_0 : i32, i32, i32
  }
}

</mosaic_0001>

<llo_original>
// kernel: tpu_custom_call.1
$region0: #{tpu_custom_call.1}
  #allocation0 [shape = 'u32[]', space=smem, size = 0x4, offset = 0x4, fixed_abs, tag = 'smem constant byte address 0x4 - core index']
  #allocation1 [shape = 'u32[72,128]{1,0:T(1,128)}', space=vmem, size = 0x9000, scoped, tag = 'internal scratch']
  #allocation2 [shape = 'f32[192,512]{1,0:T(8,128)}', space=vmem, size = 0x60000, scoped, tag = 'scratch operand']
  %s0 = inlined_call_operand.hbm [shape: f32[2,64,256], index: 0, kind: input, shape index: {}]
  %s1 = inlined_call_operand.hbm [shape: f32[3,64,192], index: 1, kind: input, shape index: {}]
  %s2 = inlined_call_operand.vmem [shape: f32[64,1], index: 2, kind: input, shape index: {}]
  %s3 = inlined_call_operand.vmem [shape: f32[1,255], index: 3, kind: input, shape index: {}]
  %s4 = inlined_call_operand.hbm [shape: f32[2,64,256], index: 4, kind: output, shape index: {}]
  %s5 = sld [smem:[#allocation0]]
  $region57: #{tpu_custom_call.1} parent=0
    _
  %s7 = ssub.s32 1, %s5
  %s8 = scalar_select 0, %s7, %s5
  $region1: #{tpu_custom_call.1} parent=0
    #allocation3 [shape = 'u8[131072]{0}', space=vmem, size = 0x20000, scoped, tag = 'input window, operand 0']
    #allocation4 [shape = 's32[2]{0}', space=sflag, size = 0x8, scoped, tag = 'scoped memory for tpu_custom_call.1']
    #allocation5 [shape = 's32[2]{0}', space=sflag, size = 0x8, scoped, tag = 'scoped memory for tpu_custom_call.1']
    #allocation6 [shape = 'u8[196608]{0}', space=vmem, size = 0x30000, scoped, tag = 'input window, operand 1, single buffered']
    #allocation7 [shape = 's32[1]{0}', space=sflag, size = 0x4, scoped, tag = 'scoped memory for tpu_custom_call.1']
    #allocation8 [shape = 'u8[131072]{0}', space=vmem, size = 0x20000, scoped, tag = 'output window, operand 0']
    %9 = vsyncpa [#allocation4], 0
    %s10 = scalar_lea.sflag [#allocation4], 1
    %11 = vsyncpa %s10, 0
    %12 = vsyncpa [#allocation7], 0
    %13 = vsyncpa [#allocation5], 0
    %s14 = scalar_lea.sflag [#allocation5], 1
    %15 = vsyncpa %s14, 0
    loop: start=0, step=1, limit=4
    $region2: #{tpu_custom_call.1} parent=1 // loop_pre_header
      _
    $region3: #{tpu_custom_call.1} parent=1 // loop_header
      %s17 = sphi 0, %s21
      %p18 = scmp.ge.s32.totalorder %s17, 4
      %s27 = sphi 0, %s29
      %s30 = sphi 0, %s27
      %s31 = sphi 0, %s30
      %s47 = sphi 0, %s31
      %s51 = sphi 0, %s51
      %s53 = sphi 0, %s51
      %s54 = sphi 0, %s53
      %s68 = sphi 0, %s54
      %s72 = sphi 0, %s72
      %s74 = sphi 0, %s72
      %s75 = sphi 0, %s74
      %s89 = sphi 0, %s75
      %s93 = sphi 0, %s93
      %s95 = sphi 0, %s93
      %s96 = sphi 0, %s95
      %s110 = sphi 0, %s96
      %s116 = sphi 0, %s118
      %s119 = sphi 0, %s116
      %s120 = sphi 0, %s119
      %s136 = sphi 0, %s120
    $region4: #{tpu_custom_call.1} parent=1 // loop_header_branch
      %20 = sbr.rel (%p18) target = $region8
    $region5: #{tpu_custom_call.1} parent=1 // loop_body
      %s22 = ssub.s32 %s17, 1
      %s23 = ssub.s32 %s17, 2
      %s24 = sadd.s32 %s17, 1
      %s25 = ssub.s32 %s17, %s24
      %p26 = scmp.eq.s32.totalorder %s25, 0
      %s28 = sadd.s32 %s27, 1
      %s29 = scalar_select %p26, %s27, %s28
      %p32 = pneg %p26
      %p33 = scmp.eq.s32.totalorder %s17, 1
      %p34 = por %p32, %p33
      %p35 = scmp.ne.s32.totalorder %s27, %s30
      %p36 = scmp.eq.s32.totalorder %s17, 0
      %p37 = por %p35, %p36
      %p38 = scmp.ne.s32.totalorder %s27, %s30
      %p39 = scmp.eq.s32.totalorder %s22, 1
      %p40 = por %p38, %p39
      %p41 = scmp.ne.s32.totalorder %s30, %s31
      %p42 = scmp.eq.s32.totalorder %s22, 0
      %p43 = por %p41, %p42
      %p44 = scmp.ne.s32.totalorder %s30, %s31
      %p45 = scmp.eq.s32.totalorder %s23, 1
      %p46 = por %p44, %p45
      %p48 = scmp.ne.s32.totalorder %s31, %s47
      %p49 = scmp.eq.s32.totalorder %s23, 0
      %p50 = por %p48, %p49
      %s52 = sadd.s32 %s51, 1
      %p55 = scmp.eq.s32.totalorder %s17, 1
      %p56 = scmp.ne.s32.totalorder %s51, %s53
      %p57 = scmp.eq.s32.totalorder %s17, 0
      %p58 = por %p56, %p57
      %p59 = scmp.ne.s32.totalorder %s51, %s53
      %p60 = scmp.eq.s32.totalorder %s22, 1
      %p61 = por %p59, %p60
      %p62 = scmp.ne.s32.totalorder %s53, %s54
      %p63 = scmp.eq.s32.totalorder %s22, 0
      %p64 = por %p62, %p63
      %p65 = scmp.ne.s32.totalorder %s53, %s54
      %p66 = scmp.eq.s32.totalorder %s23, 1
      %p67 = por %p65, %p66
      %p69 = scmp.ne.s32.totalorder %s54, %s68
      %p70 = scmp.eq.s32.totalorder %s23, 0
      %p71 = por %p69, %p70
      %s73 = sadd.s32 %s72, 1
      %p76 = scmp.eq.s32.totalorder %s17, 1
      %p77 = scmp.ne.s32.totalorder %s72, %s74
      %p78 = scmp.eq.s32.totalorder %s17, 0
      %p79 = por %p77, %p78
      %p80 = scmp.ne.s32.totalorder %s72, %s74
      %p81 = scmp.eq.s32.totalorder %s22, 1
      %p82 = por %p80, %p81
      %p83 = scmp.ne.s32.totalorder %s74, %s75
      %p84 = scmp.eq.s32.totalorder %s22, 0
      %p85 = por %p83, %p84
      %p86 = scmp.ne.s32.totalorder %s74, %s75
      %p87 = scmp.eq.s32.totalorder %s23, 1
      %p88 = por %p86, %p87
      %p90 = scmp.ne.s32.totalorder %s75, %s89
      %p91 = scmp.eq.s32.totalorder %s23, 0
      %p92 = por %p90, %p91
      %s94 = sadd.s32 %s93, 1
      %p97 = scmp.eq.s32.totalorder %s17, 1
      %p98 = scmp.ne.s32.totalorder %s93, %s95
      %p99 = scmp.eq.s32.totalorder %s17, 0
      %p100 = por %p98, %p99
      %p101 = scmp.ne.s32.totalorder %s93, %s95
      %p102 = scmp.eq.s32.totalorder %s22, 1
      %p103 = por %p101, %p102
      %p104 = scmp.ne.s32.totalorder %s95, %s96
      %p105 = scmp.eq.s32.totalorder %s22, 0
      %p106 = por %p104, %p105
      %p107 = scmp.ne.s32.totalorder %s95, %s96
      %p108 = scmp.eq.s32.totalorder %s23, 1
      %p109 = por %p107, %p108
      %p111 = scmp.ne.s32.totalorder %s96, %s110
      %p112 = scmp.eq.s32.totalorder %s23, 0
      %p113 = por %p111, %p112
      %s114 = ssub.s32 %s17, %s24
      %p115 = scmp.eq.s32.totalorder %s114, 0
      %s117 = sadd.s32 %s116, 1
      %s118 = scalar_select %p115, %s116, %s117
      %p121 = pneg %p115
      %p122 = scmp.eq.s32.totalorder %s17, 1
      %p123 = por %p121, %p122
      %p124 = scmp.ne.s32.totalorder %s116, %s119
      %p125 = scmp.eq.s32.totalorder %s17, 0
      %p126 = por %p124, %p125
      %p127 = scmp.ne.s32.totalorder %s116, %s119
      %p128 = scmp.eq.s32.totalorder %s22, 1
      %p129 = por %p127, %p128
      %p130 = scmp.ne.s32.totalorder %s119, %s120
      %p131 = scmp.eq.s32.totalorder %s22, 0
      %p132 = por %p130, %p131
      %p133 = scmp.ne.s32.totalorder %s119, %s120
      %p134 = scmp.eq.s32.totalorder %s23, 1
      %p135 = por %p133, %p134
      %p137 = scmp.ne.s32.totalorder %s120, %s136
      %p138 = scmp.eq.s32.totalorder %s23, 0
      %p139 = por %p137, %p138
      %p140 = scmp.le.s32.totalorder 1, %s17
      %p141 = scmp.lt.s32.totalorder %s17, 3
      %p142 = pnand %p140, %p141
      %p143 = pneg %p142
      // Predicated region
      $region9: #{tpu_custom_call.1} parent=5 // pred_check
        _
      $region10: #{tpu_custom_call.1} parent=5 // pred_check_branch
        %145 = sbr.rel (%p142) target = $region12
      $region11: #{tpu_custom_call.1} parent=5 // pred_region
        %s146 = ssub.s32 %s17, 1
        // Predicated region
        $region13: #{tpu_custom_call.1} parent=11 // pred_check
          %p147 = pneg %p64
        $region14: #{tpu_custom_call.1} parent=11 // pred_check_branch
          %149 = sbr.rel (%p147) target = $region16
        $region15: #{tpu_custom_call.1} parent=11 // pred_region
          %151 = vsyncadd [#allocation7], 0
          %s152 = sshll.u32 %s1, 4
          %s153 = int_to_ptr.hbm [resolvable:$true] %s152
          %s154 = sshll.u32 [#allocation6], 4
          %s155 = int_to_ptr.vmem [resolvable:$true] %s154
          %160 = dma.hbm_to_vmem [thread:$0]  %s153, 6144, %s155, [#allocation7], 256, 256, 16
        $region16: #{tpu_custom_call.1} parent=11 // pred_fallthru
          _
        // Predicated region
        $region17: #{tpu_custom_call.1} parent=11 // pred_check
          %p161 = pneg %p85
        $region18: #{tpu_custom_call.1} parent=11 // pred_check_branch
          %163 = sbr.rel (%p161) target = $region20
        $region19: #{tpu_custom_call.1} parent=11 // pred_region
          _
        $region20: #{tpu_custom_call.1} parent=11 // pred_fallthru
          _
        // Predicated region
        $region21: #{tpu_custom_call.1} parent=11 // pred_check
          %p164 = pneg %p106
        $region22: #{tpu_custom_call.1} parent=11 // pred_check_branch
          %166 = sbr.rel (%p164) target = $region24
        $region23: #{tpu_custom_call.1} parent=11 // pred_region
          _
        $region24: #{tpu_custom_call.1} parent=11 // pred_fallthru
          _
      $region12: #{tpu_custom_call.1} parent=5 // pred_fallthru
        _
      %p167 = scmp.lt.s32.totalorder %s17, 2
      // Predicated region
      $region25: #{tpu_custom_call.1} parent=5 // pred_check
        %p168 = pneg %p167
      $region26: #{tpu_custom_call.1} parent=5 // pred_check_branch
        %170 = sbr.rel (%p168) target = $region28
      $region27: #{tpu_custom_call.1} parent=5 // pred_region
        // Predicated region
        $region29: #{tpu_custom_call.1} parent=27 // pred_check
          %p171 = pneg %p37
        $region30: #{tpu_custom_call.1} parent=27 // pred_check_branch
          %173 = sbr.rel (%p171) target = $region32
        $region31: #{tpu_custom_call.1} parent=27 // pred_region
          %s174 = sand.u32 %s27, 1
          %s175 = scalar_lea.sflag [#allocation4], %s174
          %s176 = sand.u32 %s27, 1
          %s177 = smul.addr %s176, 128
          %s178 = scalar_lea.vmem [#allocation3], %s177
          %180 = vsyncadd %s175, 0
          %s181 = smul.addr %s17, 16
          %s182 = smul.addr %s181, 8
          %s183 = scalar_lea.hbm %s0, %s182
          %s184 = sshll.u32 %s183, 4
          %s185 = int_to_ptr.hbm [resolvable:$true] %s184
          %s186 = sshll.u32 %s178, 4
          %s187 = int_to_ptr.vmem [resolvable:$true] %s186
          %192 = dma.hbm_to_vmem [thread:$0]  %s185, 2048, %s187, %s175, 256, 256, 16
        $region32: #{tpu_custom_call.1} parent=27 // pred_fallthru
          _
      $region28: #{tpu_custom_call.1} parent=5 // pred_fallthru
        _
      %p193 = scmp.le.s32.totalorder 1, %s17
      %p194 = scmp.lt.s32.totalorder %s17, 3
      %p195 = pnand %p193, %p194
      %p196 = pneg %p195
      // Predicated region
      $region33: #{tpu_custom_call.1} parent=5 // pred_check
        _
      $region34: #{tpu_custom_call.1} parent=5 // pred_check_branch
        %198 = sbr.rel (%p195) target = $region36
      $region35: #{tpu_custom_call.1} parent=5 // pred_region
        %s199 = ssub.s32 %s17, 1
        %s200 = sand.u32 %s30, 1
        %s201 = scalar_lea.sflag [#allocation4], %s200
        %s202 = sand.u32 %s30, 1
        %s203 = smul.addr %s202, 128
        %s204 = scalar_lea.vmem [#allocation3], %s203
        // Predicated region
        $region37: #{tpu_custom_call.1} parent=35 // pred_check
          %p205 = pneg %p43
        $region38: #{tpu_custom_call.1} parent=35 // pred_check_branch
          %207 = sbr.rel (%p205) target = $region40
        $region39: #{tpu_custom_call.1} parent=35 // pred_region
          %209 = dma.done %s201, 2048
        $region40: #{tpu_custom_call.1} parent=35 // pred_fallthru
          _
        // Predicated region
        $region41: #{tpu_custom_call.1} parent=35 // pred_check
          %p210 = pneg %p64
        $region42: #{tpu_custom_call.1} parent=35 // pred_check_branch
          %212 = sbr.rel (%p210) target = $region44
        $region43: #{tpu_custom_call.1} parent=35 // pred_region
          %214 = dma.done [#allocation7], 6144
        $region44: #{tpu_custom_call.1} parent=35 // pred_fallthru
          _
        %s215 = sand.u32 %s30, 1
        %s216 = scalar_lea.sflag [#allocation4], %s215
        %s217 = sand.u32 %s30, 1
        %s218 = smul.addr %s217, 128
        %s219 = scalar_lea.vmem [#allocation3], %s218
        %p220 = pneg %p43
        %p221 = pneg %p40
        %p222 = pneg %p64
        %p223 = pneg %p61
        %p224 = pneg %p85
        %p225 = pneg %p82
        %p226 = pneg %p106
        %p227 = pneg %p103
        %p228 = pneg %p132
        %p229 = pneg %p129
        %s230 = sand.u32 %s119, 1
        %s231 = scalar_lea.sflag [#allocation5], %s230
        %s232 = sand.u32 %s119, 1
        %s233 = smul.addr %s232, 128
        %s234 = scalar_lea.vmem [#allocation8], %s233
        %vm235 = vcmask 1048448
        %236 = vst.msk [vmem:[#allocation2] sm:$0xff] %vm235, 0.0
        %vm237 = vcmask 7168
        %238 = vst.msk [vmem:[#allocation2 + $0x8] sm:$0xff] %vm237, 0.0
        %239 = vst.msk [vmem:[#allocation2 + $0x20] sm:$0xff] %vm235, 0.0
        %240 = vst.msk [vmem:[#allocation2 + $0x28] sm:$0xff] %vm237, 0.0
        %241 = vst.msk [vmem:[#allocation2 + $0x40] sm:$0xff] %vm235, 0.0
        %242 = vst.msk [vmem:[#allocation2 + $0x48] sm:$0xff] %vm237, 0.0
        %243 = vst.msk [vmem:[#allocation2 + $0x60] sm:$0xff] %vm235, 0.0
        %244 = vst.msk [vmem:[#allocation2 + $0x68] sm:$0xff] %vm237, 0.0
        %245 = vst.msk [vmem:[#allocation2 + $0x80] sm:$0xff] %vm235, 0.0
        %246 = vst.msk [vmem:[#allocation2 + $0x88] sm:$0xff] %vm237, 0.0
        %247 = vst.msk [vmem:[#allocation2 + $0xa0] sm:$0xff] %vm235, 0.0
        %248 = vst.msk [vmem:[#allocation2 + $0xa8] sm:$0xff] %vm237, 0.0
        %249 = vst.msk [vmem:[#allocation2 + $0xc0] sm:$0xff] %vm235, 0.0
        %250 = vst.msk [vmem:[#allocation2 + $0xc8] sm:$0xff] %vm237, 0.0
        %251 = vst.msk [vmem:[#allocation2 + $0xe0] sm:$0xff] %vm235, 0.0
        %252 = vst.msk [vmem:[#allocation2 + $0xe8] sm:$0xff] %vm237, 0.0
        %253 = vst.msk [vmem:[#allocation2 + $0x100] sm:$0xff] %vm235, 0.0
        %254 = vst.msk [vmem:[#allocation2 + $0x108] sm:$0xff] %vm237, 0.0
        %255 = vst.msk [vmem:[#allocation2 + $0x120] sm:$0xff] %vm235, 0.0
        %256 = vst.msk [vmem:[#allocation2 + $0x128] sm:$0xff] %vm237, 0.0
        %257 = vst.msk [vmem:[#allocation2 + $0x140] sm:$0xff] %vm235, 0.0
        %258 = vst.msk [vmem:[#allocation2 + $0x148] sm:$0xff] %vm237, 0.0
        %259 = vst.msk [vmem:[#allocation2 + $0x160] sm:$0xff] %vm235, 0.0
        %260 = vst.msk [vmem:[#allocation2 + $0x168] sm:$0xff] %vm237, 0.0
        %261 = vst.msk [vmem:[#allocation2 + $0x180] sm:$0xff] %vm235, 0.0
        %262 = vst.msk [vmem:[#allocation2 + $0x188] sm:$0xff] %vm237, 0.0
        %263 = vst.msk [vmem:[#allocation2 + $0x1a0] sm:$0xff] %vm235, 0.0
        %264 = vst.msk [vmem:[#allocation2 + $0x1a8] sm:$0xff] %vm237, 0.0
        %265 = vst.msk [vmem:[#allocation2 + $0x1c0] sm:$0xff] %vm235, 0.0
        %266 = vst.msk [vmem:[#allocation2 + $0x1c8] sm:$0xff] %vm237, 0.0
        %267 = vst.msk [vmem:[#allocation2 + $0x1e0] sm:$0xff] %vm235, 0.0
        %268 = vst.msk [vmem:[#allocation2 + $0x1e8] sm:$0xff] %vm237, 0.0
        %269 = vst.msk [vmem:[#allocation2 + $0x200] sm:$0xff] %vm235, 0.0
        %270 = vst.msk [vmem:[#allocation2 + $0x208] sm:$0xff] %vm237, 0.0
        %271 = vst.msk [vmem:[#allocation2 + $0x220] sm:$0xff] %vm235, 0.0
        %272 = vst.msk [vmem:[#allocation2 + $0x228] sm:$0xff] %vm237, 0.0
        %273 = vst.msk [vmem:[#allocation2 + $0x240] sm:$0xff] %vm235, 0.0
        %274 = vst.msk [vmem:[#allocation2 + $0x248] sm:$0xff] %vm237, 0.0
        %275 = vst.msk [vmem:[#allocation2 + $0x260] sm:$0xff] %vm235, 0.0
        %276 = vst.msk [vmem:[#allocation2 + $0x268] sm:$0xff] %vm237, 0.0
        %277 = vst.msk [vmem:[#allocation2 + $0x280] sm:$0xff] %vm235, 0.0
        %278 = vst.msk [vmem:[#allocation2 + $0x288] sm:$0xff] %vm237, 0.0
        %279 = vst.msk [vmem:[#allocation2 + $0x2a0] sm:$0xff] %vm235, 0.0
        %280 = vst.msk [vmem:[#allocation2 + $0x2a8] sm:$0xff] %vm237, 0.0
        %281 = vst.msk [vmem:[#allocation2 + $0x2c0] sm:$0xff] %vm235, 0.0
        %282 = vst.msk [vmem:[#allocation2 + $0x2c8] sm:$0xff] %vm237, 0.0
        %283 = vst.msk [vmem:[#allocation2 + $0x2e0] sm:$0xff] %vm235, 0.0
        %284 = vst.msk [vmem:[#allocation2 + $0x2e8] sm:$0xff] %vm237, 0.0
        %vm285 = vcmask 1048568
        %286 = vst.msk [vmem:[#allocation2 + $0x10] sm:$0xff] %vm285, 0.0
        %vm287 = vcmask 130048
        %288 = vst.msk [vmem:[#allocation2 + $0x18] sm:$0xff] %vm287, 0.0
        %289 = vst.msk [vmem:[#allocation2 + $0x30] sm:$0xff] %vm285, 0.0
        %290 = vst.msk [vmem:[#allocation2 + $0x38] sm:$0xff] %vm287, 0.0
        %291 = vst.msk [vmem:[#allocation2 + $0x50] sm:$0xff] %vm285, 0.0
        %292 = vst.msk [vmem:[#allocation2 + $0x58] sm:$0xff] %vm287, 0.0
        %293 = vst.msk [vmem:[#allocation2 + $0x70] sm:$0xff] %vm285, 0.0
        %294 = vst.msk [vmem:[#allocation2 + $0x78] sm:$0xff] %vm287, 0.0
        %295 = vst.msk [vmem:[#allocation2 + $0x90] sm:$0xff] %vm285, 0.0
        %296 = vst.msk [vmem:[#allocation2 + $0x98] sm:$0xff] %vm287, 0.0
        %297 = vst.msk [vmem:[#allocation2 + $0xb0] sm:$0xff] %vm285, 0.0
        %298 = vst.msk [vmem:[#allocation2 + $0xb8] sm:$0xff] %vm287, 0.0
        %299 = vst.msk [vmem:[#allocation2 + $0xd0] sm:$0xff] %vm285, 0.0
        %300 = vst.msk [vmem:[#allocation2 + $0xd8] sm:$0xff] %vm287, 0.0
        %301 = vst.msk [vmem:[#allocation2 + $0xf0] sm:$0xff] %vm285, 0.0
        %302 = vst.msk [vmem:[#allocation2 + $0xf8] sm:$0xff] %vm287, 0.0
        %303 = vst.msk [vmem:[#allocation2 + $0x110] sm:$0xff] %vm285, 0.0
        %304 = vst.msk [vmem:[#allocation2 + $0x118] sm:$0xff] %vm287, 0.0
        %305 = vst.msk [vmem:[#allocation2 + $0x130] sm:$0xff] %vm285, 0.0
        %306 = vst.msk [vmem:[#allocation2 + $0x138] sm:$0xff] %vm287, 0.0
        %307 = vst.msk [vmem:[#allocation2 + $0x150] sm:$0xff] %vm285, 0.0
        %308 = vst.msk [vmem:[#allocation2 + $0x158] sm:$0xff] %vm287, 0.0
        %309 = vst.msk [vmem:[#allocation2 + $0x170] sm:$0xff] %vm285, 0.0
        %310 = vst.msk [vmem:[#allocation2 + $0x178] sm:$0xff] %vm287, 0.0
        %311 = vst.msk [vmem:[#allocation2 + $0x190] sm:$0xff] %vm285, 0.0
        %312 = vst.msk [vmem:[#allocation2 + $0x198] sm:$0xff] %vm287, 0.0
        %313 = vst.msk [vmem:[#allocation2 + $0x1b0] sm:$0xff] %vm285, 0.0
        %314 = vst.msk [vmem:[#allocation2 + $0x1b8] sm:$0xff] %vm287, 0.0
        %315 = vst.msk [vmem:[#allocation2 + $0x1d0] sm:$0xff] %vm285, 0.0
        %316 = vst.msk [vmem:[#allocation2 + $0x1d8] sm:$0xff] %vm287, 0.0
        %317 = vst.msk [vmem:[#allocation2 + $0x1f0] sm:$0xff] %vm285, 0.0
        %318 = vst.msk [vmem:[#allocation2 + $0x1f8] sm:$0xff] %vm287, 0.0
        %319 = vst.msk [vmem:[#allocation2 + $0x210] sm:$0xff] %vm285, 0.0
        %320 = vst.msk [vmem:[#allocation2 + $0x218] sm:$0xff] %vm287, 0.0
        %321 = vst.msk [vmem:[#allocation2 + $0x230] sm:$0xff] %vm285, 0.0
        %322 = vst.msk [vmem:[#allocation2 + $0x238] sm:$0xff] %vm287, 0.0
        %323 = vst.msk [vmem:[#allocation2 + $0x250] sm:$0xff] %vm285, 0.0
        %324 = vst.msk [vmem:[#allocation2 + $0x258] sm:$0xff] %vm287, 0.0
        %325 = vst.msk [vmem:[#allocation2 + $0x270] sm:$0xff] %vm285, 0.0
        %326 = vst.msk [vmem:[#allocation2 + $0x278] sm:$0xff] %vm287, 0.0
        %327 = vst.msk [vmem:[#allocation2 + $0x290] sm:$0xff] %vm285, 0.0
        %328 = vst.msk [vmem:[#allocation2 + $0x298] sm:$0xff] %vm287, 0.0
        %329 = vst.msk [vmem:[#allocation2 + $0x2b0] sm:$0xff] %vm285, 0.0
        %330 = vst.msk [vmem:[#allocation2 + $0x2b8] sm:$0xff] %vm287, 0.0
        %331 = vst.msk [vmem:[#allocation2 + $0x2d0] sm:$0xff] %vm285, 0.0
        %332 = vst.msk [vmem:[#allocation2 + $0x2d8] sm:$0xff] %vm287, 0.0
        %333 = vst.msk [vmem:[#allocation2 + $0x2f0] sm:$0xff] %vm285, 0.0
        %334 = vst.msk [vmem:[#allocation2 + $0x2f8] sm:$0xff] %vm287, 0.0
        %v335 = vld [vmem:[%s3] sm:$0x3]
        %v336 = vld [vmem:[%s2] sm:$0xff]
        %v337 = vld [vmem:[%s2 + $0x8] sm:$0xff]
        %v338 = vld [vmem:[%s2 + $0x10] sm:$0xff]
        %v339 = vld [vmem:[%s2 + $0x18] sm:$0xff]
        %v340 = vld [vmem:[%s2 + $0x20] sm:$0xff]
        %v341 = vld [vmem:[%s2 + $0x28] sm:$0xff]
        %v342 = vld [vmem:[%s2 + $0x30] sm:$0xff]
        %v343 = vld [vmem:[%s2 + $0x38] sm:$0xff]
        %345 = vset.pattern.permute.xlu0 0
        %346 = vperm.xlu0 %345, %v336
        %v347 = vpop.permute.xlu0 %346
        %350 = vset.pattern.permute.xlu0 0
        %351 = vperm.xlu0 %350, %v337
        %v352 = vpop.permute.xlu0 %351
        %355 = vset.pattern.permute.xlu0 0
        %356 = vperm.xlu0 %355, %v338
        %v357 = vpop.permute.xlu0 %356
        %360 = vset.pattern.permute.xlu0 0
        %361 = vperm.xlu0 %360, %v339
        %v362 = vpop.permute.xlu0 %361
        %365 = vset.pattern.permute.xlu0 0
        %366 = vperm.xlu0 %365, %v340
        %v367 = vpop.permute.xlu0 %366
        %370 = vset.pattern.permute.xlu0 0
        %371 = vperm.xlu0 %370, %v341
        %v372 = vpop.permute.xlu0 %371
        %375 = vset.pattern.permute.xlu0 0
        %376 = vperm.xlu0 %375, %v342
        %v377 = vpop.permute.xlu0 %376
        %380 = vset.pattern.permute.xlu0 0
        %381 = vperm.xlu0 %380, %v343
        %v382 = vpop.permute.xlu0 %381
        %v384 = vld [vmem:[%s204] sm:$0xff]
        %v385 = vld [vmem:[%s204 + $0x8] sm:$0xff]
        %v386 = vld [vmem:[%s204 + $0x10] sm:$0xff]
        %v387 = vld [vmem:[%s204 + $0x18] sm:$0xff]
        %v388 = vld [vmem:[%s204 + $0x20] sm:$0xff]
        %v389 = vld [vmem:[%s204 + $0x28] sm:$0xff]
        %v390 = vld [vmem:[%s204 + $0x30] sm:$0xff]
        %v391 = vld [vmem:[%s204 + $0x38] sm:$0xff]
        %v392 = vld [vmem:[%s204 + $0x40] sm:$0xff]
        %v393 = vld [vmem:[%s204 + $0x48] sm:$0xff]
        %v394 = vld [vmem:[%s204 + $0x50] sm:$0xff]
        %v395 = vld [vmem:[%s204 + $0x58] sm:$0xff]
        %v396 = vld [vmem:[%s204 + $0x60] sm:$0xff]
        %v397 = vld [vmem:[%s204 + $0x68] sm:$0xff]
        %v398 = vld [vmem:[%s204 + $0x70] sm:$0xff]
        %v399 = vld [vmem:[%s204 + $0x78] sm:$0xff]
        %400 = vst [vmem:[#allocation2 + $0x108] sm:$0xff] %v384
        %401 = vst [vmem:[#allocation2 + $0x110] sm:$0xff] %v385
        %402 = vst [vmem:[#allocation2 + $0x128] sm:$0xff] %v386
        %403 = vst [vmem:[#allocation2 + $0x130] sm:$0xff] %v387
        %404 = vst [vmem:[#allocation2 + $0x148] sm:$0xff] %v388
        %405 = vst [vmem:[#allocation2 + $0x150] sm:$0xff] %v389
        %406 = vst [vmem:[#allocation2 + $0x168] sm:$0xff] %v390
        %407 = vst [vmem:[#allocation2 + $0x170] sm:$0xff] %v391
        %408 = vst [vmem:[#allocation2 + $0x188] sm:$0xff] %v392
        %409 = vst [vmem:[#allocation2 + $0x190] sm:$0xff] %v393
        %410 = vst [vmem:[#allocation2 + $0x1a8] sm:$0xff] %v394
        %411 = vst [vmem:[#allocation2 + $0x1b0] sm:$0xff] %v395
        %412 = vst [vmem:[#allocation2 + $0x1c8] sm:$0xff] %v396
        %413 = vst [vmem:[#allocation2 + $0x1d0] sm:$0xff] %v397
        %414 = vst [vmem:[#allocation2 + $0x1e8] sm:$0xff] %v398
        %415 = vst [vmem:[#allocation2 + $0x1f0] sm:$0xff] %v399
        %v417 = vperm.slane %v335, 0
        %v418 = vperm.slane %v335, 1
        %v421 = vmul.f32 %v384, %v417
        %v422 = vmul.f32 %v385, %v418
        %v423 = vmul.f32 %v386, %v417
        %v424 = vmul.f32 %v387, %v418
        %v425 = vmul.f32 %v388, %v417
        %v426 = vmul.f32 %v389, %v418
        %v427 = vmul.f32 %v390, %v417
        %v428 = vmul.f32 %v391, %v418
        %v429 = vmul.f32 %v392, %v417
        %v430 = vmul.f32 %v393, %v418
        %v431 = vmul.f32 %v394, %v417
        %v432 = vmul.f32 %v395, %v418
        %v433 = vmul.f32 %v396, %v417
        %v434 = vmul.f32 %v397, %v418
        %v435 = vmul.f32 %v398, %v417
        %v436 = vmul.f32 %v399, %v418
        %453 = vrot.lane.b32.xlu0 %v421, 1
        %v454 = vpop.permute.xlu0 %453
        %455 = vrot.lane.b32.xlu0 %v422, 1
        %v456 = vpop.permute.xlu0 %455
        %457 = vrot.lane.b32.xlu0 %v423, 1
        %v458 = vpop.permute.xlu0 %457
        %459 = vrot.lane.b32.xlu0 %v424, 1
        %v460 = vpop.permute.xlu0 %459
        %461 = vrot.lane.b32.xlu0 %v425, 1
        %v462 = vpop.permute.xlu0 %461
        %463 = vrot.lane.b32.xlu0 %v426, 1
        %v464 = vpop.permute.xlu0 %463
        %465 = vrot.lane.b32.xlu0 %v427, 1
        %v466 = vpop.permute.xlu0 %465
        %467 = vrot.lane.b32.xlu0 %v428, 1
        %v468 = vpop.permute.xlu0 %467
        %469 = vrot.lane.b32.xlu0 %v429, 1
        %v470 = vpop.permute.xlu0 %469
        %471 = vrot.lane.b32.xlu0 %v430, 1
        %v472 = vpop.permute.xlu0 %471
        %473 = vrot.lane.b32.xlu0 %v431, 1
        %v474 = vpop.permute.xlu0 %473
        %475 = vrot.lane.b32.xlu0 %v432, 1
        %v476 = vpop.permute.xlu0 %475
        %477 = vrot.lane.b32.xlu0 %v433, 1
        %v478 = vpop.permute.xlu0 %477
        %479 = vrot.lane.b32.xlu0 %v434, 1
        %v480 = vpop.permute.xlu0 %479
        %481 = vrot.lane.b32.xlu0 %v435, 1
        %v482 = vpop.permute.xlu0 %481
        %483 = vrot.lane.b32.xlu0 %v436, 1
        %v484 = vpop.permute.xlu0 %483
        %v485 = vsel %vm237, %v454, %v456
        %v486 = vsel %vm237, %v458, %v460
        %v487 = vsel %vm237, %v462, %v464
        %v488 = vsel %vm237, %v466, %v468
        %v489 = vsel %vm237, %v470, %v472
        %v490 = vsel %vm237, %v474, %v476
        %v491 = vsel %vm237, %v478, %v480
        %v492 = vsel %vm237, %v482, %v484
        %vm509 = vcmask 1047560
        %510 = vst.msk [vmem:[#allocation2 + $0x8] sm:$0xff] %vm509, %v454
        %511 = vst [vmem:[#allocation2 + $0x10] sm:$0xff] %v485
        %512 = vst.msk [vmem:[#allocation2 + $0x28] sm:$0xff] %vm509, %v458
        %513 = vst [vmem:[#allocation2 + $0x30] sm:$0xff] %v486
        %514 = vst.msk [vmem:[#allocation2 + $0x48] sm:$0xff] %vm509, %v462
        %515 = vst [vmem:[#allocation2 + $0x50] sm:$0xff] %v487
        %516 = vst.msk [vmem:[#allocation2 + $0x68] sm:$0xff] %vm509, %v466
        %517 = vst [vmem:[#allocation2 + $0x70] sm:$0xff] %v488
        %518 = vst.msk [vmem:[#allocation2 + $0x88] sm:$0xff] %vm509, %v470
        %519 = vst [vmem:[#allocation2 + $0x90] sm:$0xff] %v489
        %520 = vst.msk [vmem:[#allocation2 + $0xa8] sm:$0xff] %vm509, %v474
        %521 = vst [vmem:[#allocation2 + $0xb0] sm:$0xff] %v490
        %522 = vst.msk [vmem:[#allocation2 + $0xc8] sm:$0xff] %vm509, %v478
        %523 = vst [vmem:[#allocation2 + $0xd0] sm:$0xff] %v491
        %524 = vst.msk [vmem:[#allocation2 + $0xe8] sm:$0xff] %vm509, %v482
        %525 = vst [vmem:[#allocation2 + $0xf0] sm:$0xff] %v492
        %526 = vrot.lane.b32.xlu0 %v417, 1
        %v527 = vpop.permute.xlu0 %526
        %528 = vrot.lane.b32.xlu0 %v418, 1
        %v529 = vpop.permute.xlu0 %528
        %v530 = vsel %vm237, %v527, %v529
        %v533 = vmul.f32 %v384, %v527
        %v534 = vmul.f32 %v385, %v530
        %v535 = vmul.f32 %v386, %v527
        %v536 = vmul.f32 %v387, %v530
        %v537 = vmul.f32 %v388, %v527
        %v538 = vmul.f32 %v389, %v530
        %v539 = vmul.f32 %v390, %v527
        %v540 = vmul.f32 %v391, %v530
        %v541 = vmul.f32 %v392, %v527
        %v542 = vmul.f32 %v393, %v530
        %v543 = vmul.f32 %v394, %v527
        %v544 = vmul.f32 %v395, %v530
        %v545 = vmul.f32 %v396, %v527
        %v546 = vmul.f32 %v397, %v530
        %v547 = vmul.f32 %v398, %v527
        %v548 = vmul.f32 %v399, %v530
        %565 = vrot.lane.b32.xlu0 %v533, 127
        %v566 = vpop.permute.xlu0 %565
        %567 = vrot.lane.b32.xlu0 %v534, 127
        %v568 = vpop.permute.xlu0 %567
        %569 = vrot.lane.b32.xlu0 %v535, 127
        %v570 = vpop.permute.xlu0 %569
        %571 = vrot.lane.b32.xlu0 %v536, 127
        %v572 = vpop.permute.xlu0 %571
        %573 = vrot.lane.b32.xlu0 %v537, 127
        %v574 = vpop.permute.xlu0 %573
        %575 = vrot.lane.b32.xlu0 %v538, 127
        %v576 = vpop.permute.xlu0 %575
        %577 = vrot.lane.b32.xlu0 %v539, 127
        %v578 = vpop.permute.xlu0 %577
        %579 = vrot.lane.b32.xlu0 %v540, 127
        %v580 = vpop.permute.xlu0 %579
        %581 = vrot.lane.b32.xlu0 %v541, 127
        %v582 = vpop.permute.xlu0 %581
        %583 = vrot.lane.b32.xlu0 %v542, 127
        %v584 = vpop.permute.xlu0 %583
        %585 = vrot.lane.b32.xlu0 %v543, 127
        %v586 = vpop.permute.xlu0 %585
        %587 = vrot.lane.b32.xlu0 %v544, 127
        %v588 = vpop.permute.xlu0 %587
        %589 = vrot.lane.b32.xlu0 %v545, 127
        %v590 = vpop.permute.xlu0 %589
        %591 = vrot.lane.b32.xlu0 %v546, 127
        %v592 = vpop.permute.xlu0 %591
        %593 = vrot.lane.b32.xlu0 %v547, 127
        %v594 = vpop.permute.xlu0 %593
        %595 = vrot.lane.b32.xlu0 %v548, 127
        %v596 = vpop.permute.xlu0 %595
        %vm597 = vcmask 1039360
        %v598 = vsel %vm597, %v566, %v568
        %v599 = vsel %vm597, %v570, %v572
        %v600 = vsel %vm597, %v574, %v576
        %v601 = vsel %vm597, %v578, %v580
        %v602 = vsel %vm597, %v582, %v584
        %v603 = vsel %vm597, %v586, %v588
        %v604 = vsel %vm597, %v590, %v592
        %v605 = vsel %vm597, %v594, %v596
        %622 = vst [vmem:[#allocation2 + $0x208] sm:$0xff] %v598
        %623 = vst.msk [vmem:[#allocation2 + $0x210] sm:$0xff] %vm597, %v568
        %624 = vst [vmem:[#allocation2 + $0x228] sm:$0xff] %v599
        %625 = vst.msk [vmem:[#allocation2 + $0x230] sm:$0xff] %vm597, %v572
        %626 = vst [vmem:[#allocation2 + $0x248] sm:$0xff] %v600
        %627 = vst.msk [vmem:[#allocation2 + $0x250] sm:$0xff] %vm597, %v576
        %628 = vst [vmem:[#allocation2 + $0x268] sm:$0xff] %v601
        %629 = vst.msk [vmem:[#allocation2 + $0x270] sm:$0xff] %vm597, %v580
        %630 = vst [vmem:[#allocation2 + $0x288] sm:$0xff] %v602
        %631 = vst.msk [vmem:[#allocation2 + $0x290] sm:$0xff] %vm597, %v584
        %632 = vst [vmem:[#allocation2 + $0x2a8] sm:$0xff] %v603
        %633 = vst.msk [vmem:[#allocation2 + $0x2b0] sm:$0xff] %vm597, %v588
        %634 = vst [vmem:[#allocation2 + $0x2c8] sm:$0xff] %v604
        %635 = vst.msk [vmem:[#allocation2 + $0x2d0] sm:$0xff] %vm597, %v592
        %636 = vst [vmem:[#allocation2 + $0x2e8] sm:$0xff] %v605
        %637 = vst.msk [vmem:[#allocation2 + $0x2f0] sm:$0xff] %vm597, %v596
        %v638 = vld [vmem:[#allocation2] sm:$0xff]
        %v639 = vld [vmem:[#allocation2 + $0x8] sm:$0xff]
        %v640 = vld [vmem:[#allocation2 + $0x10] sm:$0xff]
        %v641 = vld [vmem:[#allocation2 + $0x20] sm:$0xff]
        %v642 = vld [vmem:[#allocation2 + $0x28] sm:$0xff]
        %v643 = vld [vmem:[#allocation2 + $0x30] sm:$0xff]
        %v644 = vld [vmem:[#allocation2 + $0x40] sm:$0xff]
        %v645 = vld [vmem:[#allocation2 + $0x48] sm:$0xff]
        %v646 = vld [vmem:[#allocation2 + $0x50] sm:$0xff]
        %v647 = vld [vmem:[#allocation2 + $0x60] sm:$0xff]
        %v648 = vld [vmem:[#allocation2 + $0x68] sm:$0xff]
        %v649 = vld [vmem:[#allocation2 + $0x70] sm:$0xff]
        %v650 = vld [vmem:[#allocation2 + $0x80] sm:$0xff]
        %v651 = vld [vmem:[#allocation2 + $0x88] sm:$0xff]
        %v652 = vld [vmem:[#allocation2 + $0x90] sm:$0xff]
        %v653 = vld [vmem:[#allocation2 + $0xa0] sm:$0xff]
        %v654 = vld [vmem:[#allocation2 + $0xa8] sm:$0xff]
        %v655 = vld [vmem:[#allocation2 + $0xb0] sm:$0xff]
        %v656 = vld [vmem:[#allocation2 + $0xc0] sm:$0xff]
        %v657 = vld [vmem:[#allocation2 + $0xc8] sm:$0xff]
        %v658 = vld [vmem:[#allocation2 + $0xd0] sm:$0xff]
        %v659 = vld [vmem:[#allocation2 + $0xe0] sm:$0xff]
        %v660 = vld [vmem:[#allocation2 + $0xe8] sm:$0xff]
        %v661 = vld [vmem:[#allocation2 + $0xf0] sm:$0xff]
        %v662 = vld [vmem:[#allocation2 + $0x100] sm:$0xff]
        %v663 = vld [vmem:[#allocation2 + $0x108] sm:$0xff]
        %v664 = vld [vmem:[#allocation2 + $0x110] sm:$0xff]
        %v665 = vld [vmem:[#allocation2 + $0x120] sm:$0xff]
        %v666 = vld [vmem:[#allocation2 + $0x128] sm:$0xff]
        %v667 = vld [vmem:[#allocation2 + $0x130] sm:$0xff]
        %v668 = vld [vmem:[#allocation2 + $0x140] sm:$0xff]
        %v669 = vld [vmem:[#allocation2 + $0x148] sm:$0xff]
        %v670 = vld [vmem:[#allocation2 + $0x150] sm:$0xff]
        %v671 = vld [vmem:[#allocation2 + $0x160] sm:$0xff]
        %v672 = vld [vmem:[#allocation2 + $0x168] sm:$0xff]
        %v673 = vld [vmem:[#allocation2 + $0x170] sm:$0xff]
        %v674 = vld [vmem:[#allocation2 + $0x180] sm:$0xff]
        %v675 = vld [vmem:[#allocation2 + $0x188] sm:$0xff]
        %v676 = vld [vmem:[#allocation2 + $0x190] sm:$0xff]
        %v677 = vld [vmem:[#allocation2 + $0x1a0] sm:$0xff]
        %v678 = vld [vmem:[#allocation2 + $0x1a8] sm:$0xff]
        %v679 = vld [vmem:[#allocation2 + $0x1b0] sm:$0xff]
        %v680 = vld [vmem:[#allocation2 + $0x1c0] sm:$0xff]
        %v681 = vld [vmem:[#allocation2 + $0x1c8] sm:$0xff]
        %v682 = vld [vmem:[#allocation2 + $0x1d0] sm:$0xff]
        %v683 = vld [vmem:[#allocation2 + $0x1e0] sm:$0xff]
        %v684 = vld [vmem:[#allocation2 + $0x1e8] sm:$0xff]
        %v685 = vld [vmem:[#allocation2 + $0x1f0] sm:$0xff]
        %v686 = vld [vmem:[#allocation2 + $0x200] sm:$0xff]
        %v687 = vld [vmem:[#allocation2 + $0x208] sm:$0xff]
        %v688 = vld [vmem:[#allocation2 + $0x210] sm:$0xff]
        %v689 = vld [vmem:[#allocation2 + $0x220] sm:$0xff]
        %v690 = vld [vmem:[#allocation2 + $0x228] sm:$0xff]
        %v691 = vld [vmem:[#allocation2 + $0x230] sm:$0xff]
        %v692 = vld [vmem:[#allocation2 + $0x240] sm:$0xff]
        %v693 = vld [vmem:[#allocation2 + $0x248] sm:$0xff]
        %v694 = vld [vmem:[#allocation2 + $0x250] sm:$0xff]
        %v695 = vld [vmem:[#allocation2 + $0x260] sm:$0xff]
        %v696 = vld [vmem:[#allocation2 + $0x268] sm:$0xff]
        %v697 = vld [vmem:[#allocation2 + $0x270] sm:$0xff]
        %v698 = vld [vmem:[#allocation2 + $0x280] sm:$0xff]
        %v699 = vld [vmem:[#allocation2 + $0x288] sm:$0xff]
        %v700 = vld [vmem:[#allocation2 + $0x290] sm:$0xff]
        %v701 = vld [vmem:[#allocation2 + $0x2a0] sm:$0xff]
        %v702 = vld [vmem:[#allocation2 + $0x2a8] sm:$0xff]
        %v703 = vld [vmem:[#allocation2 + $0x2b0] sm:$0xff]
        %v704 = vld [vmem:[#allocation2 + $0x2c0] sm:$0xff]
        %v705 = vld [vmem:[#allocation2 + $0x2c8] sm:$0xff]
        %v706 = vld [vmem:[#allocation2 + $0x2d0] sm:$0xff]
        %v707 = vld [vmem:[#allocation2 + $0x2e0] sm:$0xff]
        %v708 = vld [vmem:[#allocation2 + $0x2e8] sm:$0xff]
        %v709 = vld [vmem:[#allocation2 + $0x2f0] sm:$0xff]
        %v710 = vld [vmem:[#allocation6] sm:$0xff]
        %v711 = vld [vmem:[#allocation6 + $0x8] sm:$0xff]
        %v712 = vld [vmem:[#allocation6 + $0x10] sm:$0xff]
        %v713 = vld [vmem:[#allocation6 + $0x18] sm:$0xff]
        %v714 = vld [vmem:[#allocation6 + $0x20] sm:$0xff]
        %v715 = vld [vmem:[#allocation6 + $0x28] sm:$0xff]
        %v716 = vld [vmem:[#allocation6 + $0x30] sm:$0xff]
        %v717 = vld [vmem:[#allocation6 + $0x38] sm:$0xff]
        %v718 = vld [vmem:[#allocation6 + $0x40] sm:$0xff]
        %v719 = vld [vmem:[#allocation6 + $0x48] sm:$0xff]
        %v720 = vld [vmem:[#allocation6 + $0x50] sm:$0xff]
        %v721 = vld [vmem:[#allocation6 + $0x58] sm:$0xff]
        %v722 = vld [vmem:[#allocation6 + $0x60] sm:$0xff]
        %v723 = vld [vmem:[#allocation6 + $0x68] sm:$0xff]
        %v724 = vld [vmem:[#allocation6 + $0x70] sm:$0xff]
        %v725 = vld [vmem:[#allocation6 + $0x78] sm:$0xff]
        %798 = vrot.lane.b32.xlu0 %v638, 16
        %v799 = vpop.permute.xlu0 %798
        %800 = vrot.lane.b32.xlu0 %v639, 16
        %v801 = vpop.permute.xlu0 %800
        %802 = vrot.lane.b32.xlu0 %v640, 16
        %v803 = vpop.permute.xlu0 %802
        %804 = vrot.lane.b32.xlu0 %v641, 16
        %v805 = vpop.permute.xlu0 %804
        %806 = vrot.lane.b32.xlu0 %v642, 16
        %v807 = vpop.permute.xlu0 %806
        %808 = vrot.lane.b32.xlu0 %v643, 16
        %v809 = vpop.permute.xlu0 %808
        %810 = vrot.lane.b32.xlu0 %v644, 16
        %v811 = vpop.permute.xlu0 %810
        %812 = vrot.lane.b32.xlu0 %v645, 16
        %v813 = vpop.permute.xlu0 %812
        %814 = vrot.lane.b32.xlu0 %v646, 16
        %v815 = vpop.permute.xlu0 %814
        %816 = vrot.lane.b32.xlu0 %v647, 16
        %v817 = vpop.permute.xlu0 %816
        %818 = vrot.lane.b32.xlu0 %v648, 16
        %v819 = vpop.permute.xlu0 %818
        %820 = vrot.lane.b32.xlu0 %v649, 16
        %v821 = vpop.permute.xlu0 %820
        %822 = vrot.lane.b32.xlu0 %v650, 16
        %v823 = vpop.permute.xlu0 %822
        %824 = vrot.lane.b32.xlu0 %v651, 16
        %v825 = vpop.permute.xlu0 %824
        %826 = vrot.lane.b32.xlu0 %v652, 16
        %v827 = vpop.permute.xlu0 %826
        %828 = vrot.lane.b32.xlu0 %v653, 16
        %v829 = vpop.permute.xlu0 %828
        %830 = vrot.lane.b32.xlu0 %v654, 16
        %v831 = vpop.permute.xlu0 %830
        %832 = vrot.lane.b32.xlu0 %v655, 16
        %v833 = vpop.permute.xlu0 %832
        %834 = vrot.lane.b32.xlu0 %v656, 16
        %v835 = vpop.permute.xlu0 %834
        %836 = vrot.lane.b32.xlu0 %v657, 16
        %v837 = vpop.permute.xlu0 %836
        %838 = vrot.lane.b32.xlu0 %v658, 16
        %v839 = vpop.permute.xlu0 %838
        %840 = vrot.lane.b32.xlu0 %v659, 16
        %v841 = vpop.permute.xlu0 %840
        %842 = vrot.lane.b32.xlu0 %v660, 16
        %v843 = vpop.permute.xlu0 %842
        %844 = vrot.lane.b32.xlu0 %v661, 16
        %v845 = vpop.permute.xlu0 %844
        %846 = vrot.lane.b32.xlu0 %v662, 16
        %v847 = vpop.permute.xlu0 %846
        %848 = vrot.lane.b32.xlu0 %v663, 16
        %v849 = vpop.permute.xlu0 %848
        %850 = vrot.lane.b32.xlu0 %v664, 16
        %v851 = vpop.permute.xlu0 %850
        %852 = vrot.lane.b32.xlu0 %v665, 16
        %v853 = vpop.permute.xlu0 %852
        %854 = vrot.lane.b32.xlu0 %v666, 16
        %v855 = vpop.permute.xlu0 %854
        %856 = vrot.lane.b32.xlu0 %v667, 16
        %v857 = vpop.permute.xlu0 %856
        %858 = vrot.lane.b32.xlu0 %v668, 16
        %v859 = vpop.permute.xlu0 %858
        %860 = vrot.lane.b32.xlu0 %v669, 16
        %v861 = vpop.permute.xlu0 %860
        %862 = vrot.lane.b32.xlu0 %v670, 16
        %v863 = vpop.permute.xlu0 %862
        %864 = vrot.lane.b32.xlu0 %v671, 16
        %v865 = vpop.permute.xlu0 %864
        %866 = vrot.lane.b32.xlu0 %v672, 16
        %v867 = vpop.permute.xlu0 %866
        %868 = vrot.lane.b32.xlu0 %v673, 16
        %v869 = vpop.permute.xlu0 %868
        %870 = vrot.lane.b32.xlu0 %v674, 16
        %v871 = vpop.permute.xlu0 %870
        %872 = vrot.lane.b32.xlu0 %v675, 16
        %v873 = vpop.permute.xlu0 %872
        %874 = vrot.lane.b32.xlu0 %v676, 16
        %v875 = vpop.permute.xlu0 %874
        %876 = vrot.lane.b32.xlu0 %v677, 16
        %v877 = vpop.permute.xlu0 %876
        %878 = vrot.lane.b32.xlu0 %v678, 16
        %v879 = vpop.permute.xlu0 %878
        %880 = vrot.lane.b32.xlu0 %v679, 16
        %v881 = vpop.permute.xlu0 %880
        %882 = vrot.lane.b32.xlu0 %v680, 16
        %v883 = vpop.permute.xlu0 %882
        %884 = vrot.lane.b32.xlu0 %v681, 16
        %v885 = vpop.permute.xlu0 %884
        %886 = vrot.lane.b32.xlu0 %v682, 16
        %v887 = vpop.permute.xlu0 %886
        %888 = vrot.lane.b32.xlu0 %v683, 16
        %v889 = vpop.permute.xlu0 %888
        %890 = vrot.lane.b32.xlu0 %v684, 16
        %v891 = vpop.permute.xlu0 %890
        %892 = vrot.lane.b32.xlu0 %v685, 16
        %v893 = vpop.permute.xlu0 %892
        %894 = vrot.lane.b32.xlu0 %v686, 16
        %v895 = vpop.permute.xlu0 %894
        %896 = vrot.lane.b32.xlu0 %v687, 16
        %v897 = vpop.permute.xlu0 %896
        %898 = vrot.lane.b32.xlu0 %v688, 16
        %v899 = vpop.permute.xlu0 %898
        %900 = vrot.lane.b32.xlu0 %v689, 16
        %v901 = vpop.permute.xlu0 %900
        %902 = vrot.lane.b32.xlu0 %v690, 16
        %v903 = vpop.permute.xlu0 %902
        %904 = vrot.lane.b32.xlu0 %v691, 16
        %v905 = vpop.permute.xlu0 %904
        %906 = vrot.lane.b32.xlu0 %v692, 16
        %v907 = vpop.permute.xlu0 %906
        %908 = vrot.lane.b32.xlu0 %v693, 16
        %v909 = vpop.permute.xlu0 %908
        %910 = vrot.lane.b32.xlu0 %v694, 16
        %v911 = vpop.permute.xlu0 %910
        %912 = vrot.lane.b32.xlu0 %v695, 16
        %v913 = vpop.permute.xlu0 %912
        %914 = vrot.lane.b32.xlu0 %v696, 16
        %v915 = vpop.permute.xlu0 %914
        %916 = vrot.lane.b32.xlu0 %v697, 16
        %v917 = vpop.permute.xlu0 %916
        %918 = vrot.lane.b32.xlu0 %v698, 16
        %v919 = vpop.permute.xlu0 %918
        %920 = vrot.lane.b32.xlu0 %v699, 16
        %v921 = vpop.permute.xlu0 %920
        %922 = vrot.lane.b32.xlu0 %v700, 16
        %v923 = vpop.permute.xlu0 %922
        %924 = vrot.lane.b32.xlu0 %v701, 16
        %v925 = vpop.permute.xlu0 %924
        %926 = vrot.lane.b32.xlu0 %v702, 16
        %v927 = vpop.permute.xlu0 %926
        %928 = vrot.lane.b32.xlu0 %v703, 16
        %v929 = vpop.permute.xlu0 %928
        %930 = vrot.lane.b32.xlu0 %v704, 16
        %v931 = vpop.permute.xlu0 %930
        %932 = vrot.lane.b32.xlu0 %v705, 16
        %v933 = vpop.permute.xlu0 %932
        %934 = vrot.lane.b32.xlu0 %v706, 16
        %v935 = vpop.permute.xlu0 %934
        %936 = vrot.lane.b32.xlu0 %v707, 16
        %v937 = vpop.permute.xlu0 %936
        %938 = vrot.lane.b32.xlu0 %v708, 16
        %v939 = vpop.permute.xlu0 %938
        %940 = vrot.lane.b32.xlu0 %v709, 16
        %v941 = vpop.permute.xlu0 %940
        %v942 = vsel %vm287, %v799, %v801
        %v943 = vsel %vm287, %v801, %v803
        %v944 = vsel %vm287, %v805, %v807
        %v945 = vsel %vm287, %v807, %v809
        %v946 = vsel %vm287, %v811, %v813
        %v947 = vsel %vm287, %v813, %v815
        %v948 = vsel %vm287, %v817, %v819
        %v949 = vsel %vm287, %v819, %v821
        %v950 = vsel %vm287, %v823, %v825
        %v951 = vsel %vm287, %v825, %v827
        %v952 = vsel %vm287, %v829, %v831
        %v953 = vsel %vm287, %v831, %v833
        %v954 = vsel %vm287, %v835, %v837
        %v955 = vsel %vm287, %v837, %v839
        %v956 = vsel %vm287, %v841, %v843
        %v957 = vsel %vm287, %v843, %v845
        %v958 = vsel %vm287, %v847, %v849
        %v959 = vsel %vm287, %v849, %v851
        %v960 = vsel %vm287, %v853, %v855
        %v961 = vsel %vm287, %v855, %v857
        %v962 = vsel %vm287, %v859, %v861
        %v963 = vsel %vm287, %v861, %v863
        %v964 = vsel %vm287, %v865, %v867
        %v965 = vsel %vm287, %v867, %v869
        %v966 = vsel %vm287, %v871, %v873
        %v967 = vsel %vm287, %v873, %v875
        %v968 = vsel %vm287, %v877, %v879
        %v969 = vsel %vm287, %v879, %v881
        %v970 = vsel %vm287, %v883, %v885
        %v971 = vsel %vm287, %v885, %v887
        %v972 = vsel %vm287, %v889, %v891
        %v973 = vsel %vm287, %v891, %v893
        %v974 = vsel %vm287, %v895, %v897
        %v975 = vsel %vm287, %v897, %v899
        %v976 = vsel %vm287, %v901, %v903
        %v977 = vsel %vm287, %v903, %v905
        %v978 = vsel %vm287, %v907, %v909
        %v979 = vsel %vm287, %v909, %v911
        %v980 = vsel %vm287, %v913, %v915
        %v981 = vsel %vm287, %v915, %v917
        %v982 = vsel %vm287, %v919, %v921
        %v983 = vsel %vm287, %v921, %v923
        %v984 = vsel %vm287, %v925, %v927
        %v985 = vsel %vm287, %v927, %v929
        %v986 = vsel %vm287, %v931, %v933
        %v987 = vsel %vm287, %v933, %v935
        %v988 = vsel %vm287, %v937, %v939
        %v989 = vsel %vm287, %v939, %v941
        %vm1038 = vcmask 523264
        %v1040 = vsel %vm1038, %v711, 0
        %v1043 = vsel %vm1038, %v713, 0
        %v1046 = vsel %vm1038, %v715, 0
        %v1049 = vsel %vm1038, %v717, 0
        %v1052 = vsel %vm1038, %v719, 0
        %v1055 = vsel %vm1038, %v721, 0
        %v1058 = vsel %vm1038, %v723, 0
        %v1061 = vsel %vm1038, %v725, 0
        %1063 = vmatpush.msra.mxu0 %v972
        %1064 = vmatpush.msra.mxu0 %v970
        %1065 = vmatpush.msra.mxu0 %v968
        %1066 = vmatpush.msra.mxu0 %v966
        %1067 = vmatpush.msra.mxu0 %v964
        %1068 = vmatpush.msra.mxu0 %v962
        %1069 = vmatpush.msra.mxu0 %v960
        %1070 = vmatpush.msra.mxu0 %v958
        %1071 = vmatpush.msra.mxu0 %v956
        %1072 = vmatpush.msra.mxu0 %v954
        %1073 = vmatpush.msra.mxu0 %v952
        %1074 = vmatpush.msra.mxu0 %v950
        %1075 = vmatpush.msra.mxu0 %v948
        %1076 = vmatpush.msra.mxu0 %v946
        %1077 = vmatpush.msra.mxu0 %v944
        %1078 = vmatpush.msra.mxu0 %v942
        %1079 = vmatmul.f32.gmra.mxu0 %v710
        %v1080 = vpop.f32.mrf.mxu0
        %v1081 = vadd.f32 0.0, %v1080
        %1082 = vmatmul.f32.gmra.mxu0 %v712
        %v1083 = vpop.f32.mrf.mxu0
        %v1084 = vadd.f32 0.0, %v1083
        %1085 = vmatmul.f32.gmra.mxu0 %v714
        %v1086 = vpop.f32.mrf.mxu0
        %v1087 = vadd.f32 0.0, %v1086
        %1088 = vmatmul.f32.gmra.mxu0 %v716
        %v1089 = vpop.f32.mrf.mxu0
        %v1090 = vadd.f32 0.0, %v1089
        %1091 = vmatmul.f32.gmra.mxu0 %v718
        %v1092 = vpop.f32.mrf.mxu0
        %v1093 = vadd.f32 0.0, %v1092
        %1094 = vmatmul.f32.gmra.mxu0 %v720
        %v1095 = vpop.f32.mrf.mxu0
        %v1096 = vadd.f32 0.0, %v1095
        %1097 = vmatmul.f32.gmra.mxu0 %v722
        %v1098 = vpop.f32.mrf.mxu0
        %v1099 = vadd.f32 0.0, %v1098
        %1100 = vmatmul.f32.gmra.mxu0 %v724
        %v1101 = vpop.f32.mrf.mxu0
        %v1102 = vadd.f32 0.0, %v1101
        %1103 = vdwg.mxu0
        %1104 = vmatpush.msra.mxu0 0.0
        %1105 = vmatpush.msra.mxu0 0.0
        %1106 = vmatpush.msra.mxu0 0.0
        %1107 = vmatpush.msra.mxu0 0.0
        %1108 = vmatpush.msra.mxu0 0.0
        %1109 = vmatpush.msra.mxu0 0.0
        %1110 = vmatpush.msra.mxu0 0.0
        %1111 = vmatpush.msra.mxu0 0.0
        %1112 = vmatpush.msra.mxu0 %v988
        %1113 = vmatpush.msra.mxu0 %v986
        %1114 = vmatpush.msra.mxu0 %v984
        %1115 = vmatpush.msra.mxu0 %v982
        %1116 = vmatpush.msra.mxu0 %v980
        %1117 = vmatpush.msra.mxu0 %v978
        %1118 = vmatpush.msra.mxu0 %v976
        %1119 = vmatpush.msra.mxu0 %v974
        %1120 = vmatmul.f32.gmra.mxu0 %v1040
        %v1121 = vpop.f32.mrf.mxu0
        %v1122 = vadd.f32 %v1081, %v1121
        %1123 = vmatmul.f32.gmra.mxu0 %v1043
        %v1124 = vpop.f32.mrf.mxu0
        %v1125 = vadd.f32 %v1084, %v1124
        %1126 = vmatmul.f32.gmra.mxu0 %v1046
        %v1127 = vpop.f32.mrf.mxu0
        %v1128 = vadd.f32 %v1087, %v1127
        %1129 = vmatmul.f32.gmra.mxu0 %v1049
        %v1130 = vpop.f32.mrf.mxu0
        %v1131 = vadd.f32 %v1090, %v1130
        %1132 = vmatmul.f32.gmra.mxu0 %v1052
        %v1133 = vpop.f32.mrf.mxu0
        %v1134 = vadd.f32 %v1093, %v1133
        %1135 = vmatmul.f32.gmra.mxu0 %v1055
        %v1136 = vpop.f32.mrf.mxu0
        %v1137 = vadd.f32 %v1096, %v1136
        %1138 = vmatmul.f32.gmra.mxu0 %v1058
        %v1139 = vpop.f32.mrf.mxu0
        %v1140 = vadd.f32 %v1099, %v1139
        %1141 = vmatmul.f32.gmra.mxu0 %v1061
        %v1142 = vpop.f32.mrf.mxu0
        %v1143 = vadd.f32 %v1102, %v1142
        %1144 = vdwg.mxu0
        %1145 = vmatpush.msra.mxu0 %v973
        %1146 = vmatpush.msra.mxu0 %v971
        %1147 = vmatpush.msra.mxu0 %v969
        %1148 = vmatpush.msra.mxu0 %v967
        %1149 = vmatpush.msra.mxu0 %v965
        %1150 = vmatpush.msra.mxu0 %v963
        %1151 = vmatpush.msra.mxu0 %v961
        %1152 = vmatpush.msra.mxu0 %v959
        %1153 = vmatpush.msra.mxu0 %v957
        %1154 = vmatpush.msra.mxu0 %v955
        %1155 = vmatpush.msra.mxu0 %v953
        %1156 = vmatpush.msra.mxu0 %v951
        %1157 = vmatpush.msra.mxu0 %v949
        %1158 = vmatpush.msra.mxu0 %v947
        %1159 = vmatpush.msra.mxu0 %v945
        %1160 = vmatpush.msra.mxu0 %v943
        %1161 = vmatmul.f32.gmra.mxu0 %v710
        %v1162 = vpop.f32.mrf.mxu0
        %v1163 = vadd.f32 0.0, %v1162
        %1164 = vmatmul.f32.gmra.mxu0 %v712
        %v1165 = vpop.f32.mrf.mxu0
        %v1166 = vadd.f32 0.0, %v1165
        %1167 = vmatmul.f32.gmra.mxu0 %v714
        %v1168 = vpop.f32.mrf.mxu0
        %v1169 = vadd.f32 0.0, %v1168
        %1170 = vmatmul.f32.gmra.mxu0 %v716
        %v1171 = vpop.f32.mrf.mxu0
        %v1172 = vadd.f32 0.0, %v1171
        %1173 = vmatmul.f32.gmra.mxu0 %v718
        %v1174 = vpop.f32.mrf.mxu0
        %v1175 = vadd.f32 0.0, %v1174
        %1176 = vmatmul.f32.gmra.mxu0 %v720
        %v1177 = vpop.f32.mrf.mxu0
        %v1178 = vadd.f32 0.0, %v1177
        %1179 = vmatmul.f32.gmra.mxu0 %v722
        %v1180 = vpop.f32.mrf.mxu0
        %v1181 = vadd.f32 0.0, %v1180
        %1182 = vmatmul.f32.gmra.mxu0 %v724
        %v1183 = vpop.f32.mrf.mxu0
        %v1184 = vadd.f32 0.0, %v1183
        %1185 = vdwg.mxu0
        %1186 = vmatpush.msra.mxu0 0.0
        %1187 = vmatpush.msra.mxu0 0.0
        %1188 = vmatpush.msra.mxu0 0.0
        %1189 = vmatpush.msra.mxu0 0.0
        %1190 = vmatpush.msra.mxu0 0.0
        %1191 = vmatpush.msra.mxu0 0.0
        %1192 = vmatpush.msra.mxu0 0.0
        %1193 = vmatpush.msra.mxu0 0.0
        %1194 = vmatpush.msra.mxu0 %v989
        %1195 = vmatpush.msra.mxu0 %v987
        %1196 = vmatpush.msra.mxu0 %v985
        %1197 = vmatpush.msra.mxu0 %v983
        %1198 = vmatpush.msra.mxu0 %v981
        %1199 = vmatpush.msra.mxu0 %v979
        %1200 = vmatpush.msra.mxu0 %v977
        %1201 = vmatpush.msra.mxu0 %v975
        %1202 = vmatmul.f32.gmra.mxu0 %v1040
        %v1203 = vpop.f32.mrf.mxu0
        %v1204 = vadd.f32 %v1163, %v1203
        %1205 = vmatmul.f32.gmra.mxu0 %v1043
        %v1206 = vpop.f32.mrf.mxu0
        %v1207 = vadd.f32 %v1166, %v1206
        %1208 = vmatmul.f32.gmra.mxu0 %v1046
        %v1209 = vpop.f32.mrf.mxu0
        %v1210 = vadd.f32 %v1169, %v1209
        %1211 = vmatmul.f32.gmra.mxu0 %v1049
        %v1212 = vpop.f32.mrf.mxu0
        %v1213 = vadd.f32 %v1172, %v1212
        %1214 = vmatmul.f32.gmra.mxu0 %v1052
        %v1215 = vpop.f32.mrf.mxu0
        %v1216 = vadd.f32 %v1175, %v1215
        %1217 = vmatmul.f32.gmra.mxu0 %v1055
        %v1218 = vpop.f32.mrf.mxu0
        %v1219 = vadd.f32 %v1178, %v1218
        %1220 = vmatmul.f32.gmra.mxu0 %v1058
        %v1221 = vpop.f32.mrf.mxu0
        %v1222 = vadd.f32 %v1181, %v1221
        %1223 = vmatmul.f32.gmra.mxu0 %v1061
        %v1224 = vpop.f32.mrf.mxu0
        %v1225 = vadd.f32 %v1184, %v1224
        %1226 = vdwg.mxu0
        %v1227 = vadd.f32 %v347, %v1122
        %v1228 = vadd.f32 %v347, %v1204
        %v1229 = vadd.f32 %v352, %v1125
        %v1230 = vadd.f32 %v352, %v1207
        %v1231 = vadd.f32 %v357, %v1128
        %v1232 = vadd.f32 %v357, %v1210
        %v1233 = vadd.f32 %v362, %v1131
        %v1234 = vadd.f32 %v362, %v1213
        %v1235 = vadd.f32 %v367, %v1134
        %v1236 = vadd.f32 %v367, %v1216
        %v1237 = vadd.f32 %v372, %v1137
        %v1238 = vadd.f32 %v372, %v1219
        %v1239 = vadd.f32 %v377, %v1140
        %v1240 = vadd.f32 %v377, %v1222
        %v1241 = vadd.f32 %v382, %v1143
        %v1242 = vadd.f32 %v382, %v1225
        %s1243 = scalar_lea.vmem [#allocation6], 128
        %v1244 = vld [vmem:[%s1243] sm:$0xff]
        %v1245 = vld [vmem:[%s1243 + $0x8] sm:$0xff]
        %v1246 = vld [vmem:[%s1243 + $0x10] sm:$0xff]
        %v1247 = vld [vmem:[%s1243 + $0x18] sm:$0xff]
        %v1248 = vld [vmem:[%s1243 + $0x20] sm:$0xff]
        %v1249 = vld [vmem:[%s1243 + $0x28] sm:$0xff]
        %v1250 = vld [vmem:[%s1243 + $0x30] sm:$0xff]
        %v1251 = vld [vmem:[%s1243 + $0x38] sm:$0xff]
        %v1252 = vld [vmem:[%s1243 + $0x40] sm:$0xff]
        %v1253 = vld [vmem:[%s1243 + $0x48] sm:$0xff]
        %v1254 = vld [vmem:[%s1243 + $0x50] sm:$0xff]
        %v1255 = vld [vmem:[%s1243 + $0x58] sm:$0xff]
        %v1256 = vld [vmem:[%s1243 + $0x60] sm:$0xff]
        %v1257 = vld [vmem:[%s1243 + $0x68] sm:$0xff]
        %v1258 = vld [vmem:[%s1243 + $0x70] sm:$0xff]
        %v1259 = vld [vmem:[%s1243 + $0x78] sm:$0xff]
        %v1261 = vsel %vm1038, %v1245, 0
        %v1264 = vsel %vm1038, %v1247, 0
        %v1267 = vsel %vm1038, %v1249, 0
        %v1270 = vsel %vm1038, %v1251, 0
        %v1273 = vsel %vm1038, %v1253, 0
        %v1276 = vsel %vm1038, %v1255, 0
        %v1279 = vsel %vm1038, %v1257, 0
        %v1282 = vsel %vm1038, %v1259, 0
        %1284 = vmatpush.msra.mxu0 %v684
        %1285 = vmatpush.msra.mxu0 %v681
        %1286 = vmatpush.msra.mxu0 %v678
        %1287 = vmatpush.msra.mxu0 %v675
        %1288 = vmatpush.msra.mxu0 %v672
        %1289 = vmatpush.msra.mxu0 %v669
        %1290 = vmatpush.msra.mxu0 %v666
        %1291 = vmatpush.msra.mxu0 %v663
        %1292 = vmatpush.msra.mxu0 %v660
        %1293 = vmatpush.msra.mxu0 %v657
        %1294 = vmatpush.msra.mxu0 %v654
        %1295 = vmatpush.msra.mxu0 %v651
        %1296 = vmatpush.msra.mxu0 %v648
        %1297 = vmatpush.msra.mxu0 %v645
        %1298 = vmatpush.msra.mxu0 %v642
        %1299 = vmatpush.msra.mxu0 %v639
        %1300 = vmatmul.f32.gmra.mxu0 %v1244
        %v1301 = vpop.f32.mrf.mxu0
        %v1302 = vadd.f32 0.0, %v1301
        %1303 = vmatmul.f32.gmra.mxu0 %v1246
        %v1304 = vpop.f32.mrf.mxu0
        %v1305 = vadd.f32 0.0, %v1304
        %1306 = vmatmul.f32.gmra.mxu0 %v1248
        %v1307 = vpop.f32.mrf.mxu0
        %v1308 = vadd.f32 0.0, %v1307
        %1309 = vmatmul.f32.gmra.mxu0 %v1250
        %v1310 = vpop.f32.mrf.mxu0
        %v1311 = vadd.f32 0.0, %v1310
        %1312 = vmatmul.f32.gmra.mxu0 %v1252
        %v1313 = vpop.f32.mrf.mxu0
        %v1314 = vadd.f32 0.0, %v1313
        %1315 = vmatmul.f32.gmra.mxu0 %v1254
        %v1316 = vpop.f32.mrf.mxu0
        %v1317 = vadd.f32 0.0, %v1316
        %1318 = vmatmul.f32.gmra.mxu0 %v1256
        %v1319 = vpop.f32.mrf.mxu0
        %v1320 = vadd.f32 0.0, %v1319
        %1321 = vmatmul.f32.gmra.mxu0 %v1258
        %v1322 = vpop.f32.mrf.mxu0
        %v1323 = vadd.f32 0.0, %v1322
        %1324 = vdwg.mxu0
        %1325 = vmatpush.msra.mxu0 0.0
        %1326 = vmatpush.msra.mxu0 0.0
        %1327 = vmatpush.msra.mxu0 0.0
        %1328 = vmatpush.msra.mxu0 0.0
        %1329 = vmatpush.msra.mxu0 0.0
        %1330 = vmatpush.msra.mxu0 0.0
        %1331 = vmatpush.msra.mxu0 0.0
        %1332 = vmatpush.msra.mxu0 0.0
        %1333 = vmatpush.msra.mxu0 %v708
        %1334 = vmatpush.msra.mxu0 %v705
        %1335 = vmatpush.msra.mxu0 %v702
        %1336 = vmatpush.msra.mxu0 %v699
        %1337 = vmatpush.msra.mxu0 %v696
        %1338 = vmatpush.msra.mxu0 %v693
        %1339 = vmatpush.msra.mxu0 %v690
        %1340 = vmatpush.msra.mxu0 %v687
        %1341 = vmatmul.f32.gmra.mxu0 %v1261
        %v1342 = vpop.f32.mrf.mxu0
        %v1343 = vadd.f32 %v1302, %v1342
        %1344 = vmatmul.f32.gmra.mxu0 %v1264
        %v1345 = vpop.f32.mrf.mxu0
        %v1346 = vadd.f32 %v1305, %v1345
        %1347 = vmatmul.f32.gmra.mxu0 %v1267
        %v1348 = vpop.f32.mrf.mxu0
        %v1349 = vadd.f32 %v1308, %v1348
        %1350 = vmatmul.f32.gmra.mxu0 %v1270
        %v1351 = vpop.f32.mrf.mxu0
        %v1352 = vadd.f32 %v1311, %v1351
        %1353 = vmatmul.f32.gmra.mxu0 %v1273
        %v1354 = vpop.f32.mrf.mxu0
        %v1355 = vadd.f32 %v1314, %v1354
        %1356 = vmatmul.f32.gmra.mxu0 %v1276
        %v1357 = vpop.f32.mrf.mxu0
        %v1358 = vadd.f32 %v1317, %v1357
        %1359 = vmatmul.f32.gmra.mxu0 %v1279
        %v1360 = vpop.f32.mrf.mxu0
        %v1361 = vadd.f32 %v1320, %v1360
        %1362 = vmatmul.f32.gmra.mxu0 %v1282
        %v1363 = vpop.f32.mrf.mxu0
        %v1364 = vadd.f32 %v1323, %v1363
        %1365 = vdwg.mxu0
        %1366 = vmatpush.msra.mxu0 %v685
        %1367 = vmatpush.msra.mxu0 %v682
        %1368 = vmatpush.msra.mxu0 %v679
        %1369 = vmatpush.msra.mxu0 %v676
        %1370 = vmatpush.msra.mxu0 %v673
        %1371 = vmatpush.msra.mxu0 %v670
        %1372 = vmatpush.msra.mxu0 %v667
        %1373 = vmatpush.msra.mxu0 %v664
        %1374 = vmatpush.msra.mxu0 %v661
        %1375 = vmatpush.msra.mxu0 %v658
        %1376 = vmatpush.msra.mxu0 %v655
        %1377 = vmatpush.msra.mxu0 %v652
        %1378 = vmatpush.msra.mxu0 %v649
        %1379 = vmatpush.msra.mxu0 %v646
        %1380 = vmatpush.msra.mxu0 %v643
        %1381 = vmatpush.msra.mxu0 %v640
        %1382 = vmatmul.f32.gmra.mxu0 %v1244
        %v1383 = vpop.f32.mrf.mxu0
        %v1384 = vadd.f32 0.0, %v1383
        %1385 = vmatmul.f32.gmra.mxu0 %v1246
        %v1386 = vpop.f32.mrf.mxu0
        %v1387 = vadd.f32 0.0, %v1386
        %1388 = vmatmul.f32.gmra.mxu0 %v1248
        %v1389 = vpop.f32.mrf.mxu0
        %v1390 = vadd.f32 0.0, %v1389
        %1391 = vmatmul.f32.gmra.mxu0 %v1250
        %v1392 = vpop.f32.mrf.mxu0
        %v1393 = vadd.f32 0.0, %v1392
        %1394 = vmatmul.f32.gmra.mxu0 %v1252
        %v1395 = vpop.f32.mrf.mxu0
        %v1396 = vadd.f32 0.0, %v1395
        %1397 = vmatmul.f32.gmra.mxu0 %v1254
        %v1398 = vpop.f32.mrf.mxu0
        %v1399 = vadd.f32 0.0, %v1398
        %1400 = vmatmul.f32.gmra.mxu0 %v1256
        %v1401 = vpop.f32.mrf.mxu0
        %v1402 = vadd.f32 0.0, %v1401
        %1403 = vmatmul.f32.gmra.mxu0 %v1258
        %v1404 = vpop.f32.mrf.mxu0
        %v1405 = vadd.f32 0.0, %v1404
        %1406 = vdwg.mxu0
        %1407 = vmatpush.msra.mxu0 0.0
        %1408 = vmatpush.msra.mxu0 0.0
        %1409 = vmatpush.msra.mxu0 0.0
        %1410 = vmatpush.msra.mxu0 0.0
        %1411 = vmatpush.msra.mxu0 0.0
        %1412 = vmatpush.msra.mxu0 0.0
        %1413 = vmatpush.msra.mxu0 0.0
        %1414 = vmatpush.msra.mxu0 0.0
        %1415 = vmatpush.msra.mxu0 %v709
        %1416 = vmatpush.msra.mxu0 %v706
        %1417 = vmatpush.msra.mxu0 %v703
        %1418 = vmatpush.msra.mxu0 %v700
        %1419 = vmatpush.msra.mxu0 %v697
        %1420 = vmatpush.msra.mxu0 %v694
        %1421 = vmatpush.msra.mxu0 %v691
        %1422 = vmatpush.msra.mxu0 %v688
        %1423 = vmatmul.f32.gmra.mxu0 %v1261
        %v1424 = vpop.f32.mrf.mxu0
        %v1425 = vadd.f32 %v1384, %v1424
        %1426 = vmatmul.f32.gmra.mxu0 %v1264
        %v1427 = vpop.f32.mrf.mxu0
        %v1428 = vadd.f32 %v1387, %v1427
        %1429 = vmatmul.f32.gmra.mxu0 %v1267
        %v1430 = vpop.f32.mrf.mxu0
        %v1431 = vadd.f32 %v1390, %v1430
        %1432 = vmatmul.f32.gmra.mxu0 %v1270
        %v1433 = vpop.f32.mrf.mxu0
        %v1434 = vadd.f32 %v1393, %v1433
        %1435 = vmatmul.f32.gmra.mxu0 %v1273
        %v1436 = vpop.f32.mrf.mxu0
        %v1437 = vadd.f32 %v1396, %v1436
        %1438 = vmatmul.f32.gmra.mxu0 %v1276
        %v1439 = vpop.f32.mrf.mxu0
        %v1440 = vadd.f32 %v1399, %v1439
        %1441 = vmatmul.f32.gmra.mxu0 %v1279
        %v1442 = vpop.f32.mrf.mxu0
        %v1443 = vadd.f32 %v1402, %v1442
        %1444 = vmatmul.f32.gmra.mxu0 %v1282
        %v1445 = vpop.f32.mrf.mxu0
        %v1446 = vadd.f32 %v1405, %v1445
        %1447 = vdwg.mxu0
        %v1448 = vadd.f32 %v1227, %v1343
        %v1449 = vadd.f32 %v1228, %v1425
        %v1450 = vadd.f32 %v1229, %v1346
        %v1451 = vadd.f32 %v1230, %v1428
        %v1452 = vadd.f32 %v1231, %v1349
        %v1453 = vadd.f32 %v1232, %v1431
        %v1454 = vadd.f32 %v1233, %v1352
        %v1455 = vadd.f32 %v1234, %v1434
        %v1456 = vadd.f32 %v1235, %v1355
        %v1457 = vadd.f32 %v1236, %v1437
        %v1458 = vadd.f32 %v1237, %v1358
        %v1459 = vadd.f32 %v1238, %v1440
        %v1460 = vadd.f32 %v1239, %v1361
        %v1461 = vadd.f32 %v1240, %v1443
        %v1462 = vadd.f32 %v1241, %v1364
        %v1463 = vadd.f32 %v1242, %v1446
        %v1464 = vld [vmem:[#allocation2 + $0x8] sm:$0xff]
        %v1465 = vld [vmem:[#allocation2 + $0x10] sm:$0xff]
        %v1466 = vld [vmem:[#allocation2 + $0x18] sm:$0xff]
        %v1467 = vld [vmem:[#allocation2 + $0x28] sm:$0xff]
        %v1468 = vld [vmem:[#allocation2 + $0x30] sm:$0xff]
        %v1469 = vld [vmem:[#allocation2 + $0x38] sm:$0xff]
        %v1470 = vld [vmem:[#allocation2 + $0x48] sm:$0xff]
        %v1471 = vld [vmem:[#allocation2 + $0x50] sm:$0xff]
        %v1472 = vld [vmem:[#allocation2 + $0x58] sm:$0xff]
        %v1473 = vld [vmem:[#allocation2 + $0x68] sm:$0xff]
        %v1474 = vld [vmem:[#allocation2 + $0x70] sm:$0xff]
        %v1475 = vld [vmem:[#allocation2 + $0x78] sm:$0xff]
        %v1476 = vld [vmem:[#allocation2 + $0x88] sm:$0xff]
        %v1477 = vld [vmem:[#allocation2 + $0x90] sm:$0xff]
        %v1478 = vld [vmem:[#allocation2 + $0x98] sm:$0xff]
        %v1479 = vld [vmem:[#allocation2 + $0xa8] sm:$0xff]
        %v1480 = vld [vmem:[#allocation2 + $0xb0] sm:$0xff]
        %v1481 = vld [vmem:[#allocation2 + $0xb8] sm:$0xff]
        %v1482 = vld [vmem:[#allocation2 + $0xc8] sm:$0xff]
        %v1483 = vld [vmem:[#allocation2 + $0xd0] sm:$0xff]
        %v1484 = vld [vmem:[#allocation2 + $0xd8] sm:$0xff]
        %v1485 = vld [vmem:[#allocation2 + $0xe8] sm:$0xff]
        %v1486 = vld [vmem:[#allocation2 + $0xf0] sm:$0xff]
        %v1487 = vld [vmem:[#allocation2 + $0xf8] sm:$0xff]
        %v1488 = vld [vmem:[#allocation2 + $0x108] sm:$0xff]
        %v1489 = vld [vmem:[#allocation2 + $0x110] sm:$0xff]
        %v1490 = vld [vmem:[#allocation2 + $0x118] sm:$0xff]
        %v1491 = vld [vmem:[#allocation2 + $0x128] sm:$0xff]
        %v1492 = vld [vmem:[#allocation2 + $0x130] sm:$0xff]
        %v1493 = vld [vmem:[#allocation2 + $0x138] sm:$0xff]
        %v1494 = vld [vmem:[#allocation2 + $0x148] sm:$0xff]
        %v1495 = vld [vmem:[#allocation2 + $0x150] sm:$0xff]
        %v1496 = vld [vmem:[#allocation2 + $0x158] sm:$0xff]
        %v1497 = vld [vmem:[#allocation2 + $0x168] sm:$0xff]
        %v1498 = vld [vmem:[#allocation2 + $0x170] sm:$0xff]
        %v1499 = vld [vmem:[#allocation2 + $0x178] sm:$0xff]
        %v1500 = vld [vmem:[#allocation2 + $0x188] sm:$0xff]
        %v1501 = vld [vmem:[#allocation2 + $0x190] sm:$0xff]
        %v1502 = vld [vmem:[#allocation2 + $0x198] sm:$0xff]
        %v1503 = vld [vmem:[#allocation2 + $0x1a8] sm:$0xff]
        %v1504 = vld [vmem:[#allocation2 + $0x1b0] sm:$0xff]
        %v1505 = vld [vmem:[#allocation2 + $0x1b8] sm:$0xff]
        %v1506 = vld [vmem:[#allocation2 + $0x1c8] sm:$0xff]
        %v1507 = vld [vmem:[#allocation2 + $0x1d0] sm:$0xff]
        %v1508 = vld [vmem:[#allocation2 + $0x1d8] sm:$0xff]
        %v1509 = vld [vmem:[#allocation2 + $0x1e8] sm:$0xff]
        %v1510 = vld [vmem:[#allocation2 + $0x1f0] sm:$0xff]
        %v1511 = vld [vmem:[#allocation2 + $0x1f8] sm:$0xff]
        %v1512 = vld [vmem:[#allocation2 + $0x208] sm:$0xff]
        %v1513 = vld [vmem:[#allocation2 + $0x210] sm:$0xff]
        %v1514 = vld [vmem:[#allocation2 + $0x218] sm:$0xff]
        %v1515 = vld [vmem:[#allocation2 + $0x228] sm:$0xff]
        %v1516 = vld [vmem:[#allocation2 + $0x230] sm:$0xff]
        %v1517 = vld [vmem:[#allocation2 + $0x238] sm:$0xff]
        %v1518 = vld [vmem:[#allocation2 + $0x248] sm:$0xff]
        %v1519 = vld [vmem:[#allocation2 + $0x250] sm:$0xff]
        %v1520 = vld [vmem:[#allocation2 + $0x258] sm:$0xff]
        %v1521 = vld [vmem:[#allocation2 + $0x268] sm:$0xff]
        %v1522 = vld [vmem:[#allocation2 + $0x270] sm:$0xff]
        %v1523 = vld [vmem:[#allocation2 + $0x278] sm:$0xff]
        %v1524 = vld [vmem:[#allocation2 + $0x288] sm:$0xff]
        %v1525 = vld [vmem:[#allocation2 + $0x290] sm:$0xff]
        %v1526 = vld [vmem:[#allocation2 + $0x298] sm:$0xff]
        %v1527 = vld [vmem:[#allocation2 + $0x2a8] sm:$0xff]
        %v1528 = vld [vmem:[#allocation2 + $0x2b0] sm:$0xff]
        %v1529 = vld [vmem:[#allocation2 + $0x2b8] sm:$0xff]
        %v1530 = vld [vmem:[#allocation2 + $0x2c8] sm:$0xff]
        %v1531 = vld [vmem:[#allocation2 + $0x2d0] sm:$0xff]
        %v1532 = vld [vmem:[#allocation2 + $0x2d8] sm:$0xff]
        %v1533 = vld [vmem:[#allocation2 + $0x2e8] sm:$0xff]
        %v1534 = vld [vmem:[#allocation2 + $0x2f0] sm:$0xff]
        %v1535 = vld [vmem:[#allocation2 + $0x2f8] sm:$0xff]
        %s1536 = scalar_lea.vmem [#allocation6], 256
        %v1537 = vld [vmem:[%s1536] sm:$0xff]
        %v1538 = vld [vmem:[%s1536 + $0x8] sm:$0xff]
        %v1539 = vld [vmem:[%s1536 + $0x10] sm:$0xff]
        %v1540 = vld [vmem:[%s1536 + $0x18] sm:$0xff]
        %v1541 = vld [vmem:[%s1536 + $0x20] sm:$0xff]
        %v1542 = vld [vmem:[%s1536 + $0x28] sm:$0xff]
        %v1543 = vld [vmem:[%s1536 + $0x30] sm:$0xff]
        %v1544 = vld [vmem:[%s1536 + $0x38] sm:$0xff]
        %v1545 = vld [vmem:[%s1536 + $0x40] sm:$0xff]
        %v1546 = vld [vmem:[%s1536 + $0x48] sm:$0xff]
        %v1547 = vld [vmem:[%s1536 + $0x50] sm:$0xff]
        %v1548 = vld [vmem:[%s1536 + $0x58] sm:$0xff]
        %v1549 = vld [vmem:[%s1536 + $0x60] sm:$0xff]
        %v1550 = vld [vmem:[%s1536 + $0x68] sm:$0xff]
        %v1551 = vld [vmem:[%s1536 + $0x70] sm:$0xff]
        %v1552 = vld [vmem:[%s1536 + $0x78] sm:$0xff]
        %1625 = vrot.lane.b32.xlu0 %v1464, 112
        %v1626 = vpop.permute.xlu0 %1625
        %1627 = vrot.lane.b32.xlu0 %v1465, 112
        %v1628 = vpop.permute.xlu0 %1627
        %1629 = vrot.lane.b32.xlu0 %v1466, 112
        %v1630 = vpop.permute.xlu0 %1629
        %1631 = vrot.lane.b32.xlu0 %v1467, 112
        %v1632 = vpop.permute.xlu0 %1631
        %1633 = vrot.lane.b32.xlu0 %v1468, 112
        %v1634 = vpop.permute.xlu0 %1633
        %1635 = vrot.lane.b32.xlu0 %v1469, 112
        %v1636 = vpop.permute.xlu0 %1635
        %1637 = vrot.lane.b32.xlu0 %v1470, 112
        %v1638 = vpop.permute.xlu0 %1637
        %1639 = vrot.lane.b32.xlu0 %v1471, 112
        %v1640 = vpop.permute.xlu0 %1639
        %1641 = vrot.lane.b32.xlu0 %v1472, 112
        %v1642 = vpop.permute.xlu0 %1641
        %1643 = vrot.lane.b32.xlu0 %v1473, 112
        %v1644 = vpop.permute.xlu0 %1643
        %1645 = vrot.lane.b32.xlu0 %v1474, 112
        %v1646 = vpop.permute.xlu0 %1645
        %1647 = vrot.lane.b32.xlu0 %v1475, 112
        %v1648 = vpop.permute.xlu0 %1647
        %1649 = vrot.lane.b32.xlu0 %v1476, 112
        %v1650 = vpop.permute.xlu0 %1649
        %1651 = vrot.lane.b32.xlu0 %v1477, 112
        %v1652 = vpop.permute.xlu0 %1651
        %1653 = vrot.lane.b32.xlu0 %v1478, 112
        %v1654 = vpop.permute.xlu0 %1653
        %1655 = vrot.lane.b32.xlu0 %v1479, 112
        %v1656 = vpop.permute.xlu0 %1655
        %1657 = vrot.lane.b32.xlu0 %v1480, 112
        %v1658 = vpop.permute.xlu0 %1657
        %1659 = vrot.lane.b32.xlu0 %v1481, 112
        %v1660 = vpop.permute.xlu0 %1659
        %1661 = vrot.lane.b32.xlu0 %v1482, 112
        %v1662 = vpop.permute.xlu0 %1661
        %1663 = vrot.lane.b32.xlu0 %v1483, 112
        %v1664 = vpop.permute.xlu0 %1663
        %1665 = vrot.lane.b32.xlu0 %v1484, 112
        %v1666 = vpop.permute.xlu0 %1665
        %1667 = vrot.lane.b32.xlu0 %v1485, 112
        %v1668 = vpop.permute.xlu0 %1667
        %1669 = vrot.lane.b32.xlu0 %v1486, 112
        %v1670 = vpop.permute.xlu0 %1669
        %1671 = vrot.lane.b32.xlu0 %v1487, 112
        %v1672 = vpop.permute.xlu0 %1671
        %1673 = vrot.lane.b32.xlu0 %v1488, 112
        %v1674 = vpop.permute.xlu0 %1673
        %1675 = vrot.lane.b32.xlu0 %v1489, 112
        %v1676 = vpop.permute.xlu0 %1675
        %1677 = vrot.lane.b32.xlu0 %v1490, 112
        %v1678 = vpop.permute.xlu0 %1677
        %1679 = vrot.lane.b32.xlu0 %v1491, 112
        %v1680 = vpop.permute.xlu0 %1679
        %1681 = vrot.lane.b32.xlu0 %v1492, 112
        %v1682 = vpop.permute.xlu0 %1681
        %1683 = vrot.lane.b32.xlu0 %v1493, 112
        %v1684 = vpop.permute.xlu0 %1683
        %1685 = vrot.lane.b32.xlu0 %v1494, 112
        %v1686 = vpop.permute.xlu0 %1685
        %1687 = vrot.lane.b32.xlu0 %v1495, 112
        %v1688 = vpop.permute.xlu0 %1687
        %1689 = vrot.lane.b32.xlu0 %v1496, 112
        %v1690 = vpop.permute.xlu0 %1689
        %1691 = vrot.lane.b32.xlu0 %v1497, 112
        %v1692 = vpop.permute.xlu0 %1691
        %1693 = vrot.lane.b32.xlu0 %v1498, 112
        %v1694 = vpop.permute.xlu0 %1693
        %1695 = vrot.lane.b32.xlu0 %v1499, 112
        %v1696 = vpop.permute.xlu0 %1695
        %1697 = vrot.lane.b32.xlu0 %v1500, 112
        %v1698 = vpop.permute.xlu0 %1697
        %1699 = vrot.lane.b32.xlu0 %v1501, 112
        %v1700 = vpop.permute.xlu0 %1699
        %1701 = vrot.lane.b32.xlu0 %v1502, 112
        %v1702 = vpop.permute.xlu0 %1701
        %1703 = vrot.lane.b32.xlu0 %v1503, 112
        %v1704 = vpop.permute.xlu0 %1703
        %1705 = vrot.lane.b32.xlu0 %v1504, 112
        %v1706 = vpop.permute.xlu0 %1705
        %1707 = vrot.lane.b32.xlu0 %v1505, 112
        %v1708 = vpop.permute.xlu0 %1707
        %1709 = vrot.lane.b32.xlu0 %v1506, 112
        %v1710 = vpop.permute.xlu0 %1709
        %1711 = vrot.lane.b32.xlu0 %v1507, 112
        %v1712 = vpop.permute.xlu0 %1711
        %1713 = vrot.lane.b32.xlu0 %v1508, 112
        %v1714 = vpop.permute.xlu0 %1713
        %1715 = vrot.lane.b32.xlu0 %v1509, 112
        %v1716 = vpop.permute.xlu0 %1715
        %1717 = vrot.lane.b32.xlu0 %v1510, 112
        %v1718 = vpop.permute.xlu0 %1717
        %1719 = vrot.lane.b32.xlu0 %v1511, 112
        %v1720 = vpop.permute.xlu0 %1719
        %1721 = vrot.lane.b32.xlu0 %v1512, 112
        %v1722 = vpop.permute.xlu0 %1721
        %1723 = vrot.lane.b32.xlu0 %v1513, 112
        %v1724 = vpop.permute.xlu0 %1723
        %1725 = vrot.lane.b32.xlu0 %v1514, 112
        %v1726 = vpop.permute.xlu0 %1725
        %1727 = vrot.lane.b32.xlu0 %v1515, 112
        %v1728 = vpop.permute.xlu0 %1727
        %1729 = vrot.lane.b32.xlu0 %v1516, 112
        %v1730 = vpop.permute.xlu0 %1729
        %1731 = vrot.lane.b32.xlu0 %v1517, 112
        %v1732 = vpop.permute.xlu0 %1731
        %1733 = vrot.lane.b32.xlu0 %v1518, 112
        %v1734 = vpop.permute.xlu0 %1733
        %1735 = vrot.lane.b32.xlu0 %v1519, 112
        %v1736 = vpop.permute.xlu0 %1735
        %1737 = vrot.lane.b32.xlu0 %v1520, 112
        %v1738 = vpop.permute.xlu0 %1737
        %1739 = vrot.lane.b32.xlu0 %v1521, 112
        %v1740 = vpop.permute.xlu0 %1739
        %1741 = vrot.lane.b32.xlu0 %v1522, 112
        %v1742 = vpop.permute.xlu0 %1741
        %1743 = vrot.lane.b32.xlu0 %v1523, 112
        %v1744 = vpop.permute.xlu0 %1743
        %1745 = vrot.lane.b32.xlu0 %v1524, 112
        %v1746 = vpop.permute.xlu0 %1745
        %1747 = vrot.lane.b32.xlu0 %v1525, 112
        %v1748 = vpop.permute.xlu0 %1747
        %1749 = vrot.lane.b32.xlu0 %v1526, 112
        %v1750 = vpop.permute.xlu0 %1749
        %1751 = vrot.lane.b32.xlu0 %v1527, 112
        %v1752 = vpop.permute.xlu0 %1751
        %1753 = vrot.lane.b32.xlu0 %v1528, 112
        %v1754 = vpop.permute.xlu0 %1753
        %1755 = vrot.lane.b32.xlu0 %v1529, 112
        %v1756 = vpop.permute.xlu0 %1755
        %1757 = vrot.lane.b32.xlu0 %v1530, 112
        %v1758 = vpop.permute.xlu0 %1757
        %1759 = vrot.lane.b32.xlu0 %v1531, 112
        %v1760 = vpop.permute.xlu0 %1759
        %1761 = vrot.lane.b32.xlu0 %v1532, 112
        %v1762 = vpop.permute.xlu0 %1761
        %1763 = vrot.lane.b32.xlu0 %v1533, 112
        %v1764 = vpop.permute.xlu0 %1763
        %1765 = vrot.lane.b32.xlu0 %v1534, 112
        %v1766 = vpop.permute.xlu0 %1765
        %1767 = vrot.lane.b32.xlu0 %v1535, 112
        %v1768 = vpop.permute.xlu0 %1767
        %vm1769 = vcmask 916480
        %v1770 = vsel %vm1769, %v1626, %v1628
        %v1771 = vsel %vm1769, %v1628, %v1630
        %v1772 = vsel %vm1769, %v1632, %v1634
        %v1773 = vsel %vm1769, %v1634, %v1636
        %v1774 = vsel %vm1769, %v1638, %v1640
        %v1775 = vsel %vm1769, %v1640, %v1642
        %v1776 = vsel %vm1769, %v1644, %v1646
        %v1777 = vsel %vm1769, %v1646, %v1648
        %v1778 = vsel %vm1769, %v1650, %v1652
        %v1779 = vsel %vm1769, %v1652, %v1654
        %v1780 = vsel %vm1769, %v1656, %v1658
        %v1781 = vsel %vm1769, %v1658, %v1660
        %v1782 = vsel %vm1769, %v1662, %v1664
        %v1783 = vsel %vm1769, %v1664, %v1666
        %v1784 = vsel %vm1769, %v1668, %v1670
        %v1785 = vsel %vm1769, %v1670, %v1672
        %v1786 = vsel %vm1769, %v1674, %v1676
        %v1787 = vsel %vm1769, %v1676, %v1678
        %v1788 = vsel %vm1769, %v1680, %v1682
        %v1789 = vsel %vm1769, %v1682, %v1684
        %v1790 = vsel %vm1769, %v1686, %v1688
        %v1791 = vsel %vm1769, %v1688, %v1690
        %v1792 = vsel %vm1769, %v1692, %v1694
        %v1793 = vsel %vm1769, %v1694, %v1696
        %v1794 = vsel %vm1769, %v1698, %v1700
        %v1795 = vsel %vm1769, %v1700, %v1702
        %v1796 = vsel %vm1769, %v1704, %v1706
        %v1797 = vsel %vm1769, %v1706, %v1708
        %v1798 = vsel %vm1769, %v1710, %v1712
        %v1799 = vsel %vm1769, %v1712, %v1714
        %v1800 = vsel %vm1769, %v1716, %v1718
        %v1801 = vsel %vm1769, %v1718, %v1720
        %v1802 = vsel %vm1769, %v1722, %v1724
        %v1803 = vsel %vm1769, %v1724, %v1726
        %v1804 = vsel %vm1769, %v1728, %v1730
        %v1805 = vsel %vm1769, %v1730, %v1732
        %v1806 = vsel %vm1769, %v1734, %v1736
        %v1807 = vsel %vm1769, %v1736, %v1738
        %v1808 = vsel %vm1769, %v1740, %v1742
        %v1809 = vsel %vm1769, %v1742, %v1744
        %v1810 = vsel %vm1769, %v1746, %v1748
        %v1811 = vsel %vm1769, %v1748, %v1750
        %v1812 = vsel %vm1769, %v1752, %v1754
        %v1813 = vsel %vm1769, %v1754, %v1756
        %v1814 = vsel %vm1769, %v1758, %v1760
        %v1815 = vsel %vm1769, %v1760, %v1762
        %v1816 = vsel %vm1769, %v1764, %v1766
        %v1817 = vsel %vm1769, %v1766, %v1768
        %v1867 = vsel %vm1038, %v1538, 0
        %v1870 = vsel %vm1038, %v1540, 0
        %v1873 = vsel %vm1038, %v1542, 0
        %v1876 = vsel %vm1038, %v1544, 0
        %v1879 = vsel %vm1038, %v1546, 0
        %v1882 = vsel %vm1038, %v1548, 0
        %v1885 = vsel %vm1038, %v1550, 0
        %v1888 = vsel %vm1038, %v1552, 0
        %1890 = vmatpush.msra.mxu0 %v1800
        %1891 = vmatpush.msra.mxu0 %v1798
        %1892 = vmatpush.msra.mxu0 %v1796
        %1893 = vmatpush.msra.mxu0 %v1794
        %1894 = vmatpush.msra.mxu0 %v1792
        %1895 = vmatpush.msra.mxu0 %v1790
        %1896 = vmatpush.msra.mxu0 %v1788
        %1897 = vmatpush.msra.mxu0 %v1786
        %1898 = vmatpush.msra.mxu0 %v1784
        %1899 = vmatpush.msra.mxu0 %v1782
        %1900 = vmatpush.msra.mxu0 %v1780
        %1901 = vmatpush.msra.mxu0 %v1778
        %1902 = vmatpush.msra.mxu0 %v1776
        %1903 = vmatpush.msra.mxu0 %v1774
        %1904 = vmatpush.msra.mxu0 %v1772
        %1905 = vmatpush.msra.mxu0 %v1770
        %1906 = vmatmul.f32.gmra.mxu0 %v1537
        %v1907 = vpop.f32.mrf.mxu0
        %v1908 = vadd.f32 0.0, %v1907
        %1909 = vmatmul.f32.gmra.mxu0 %v1539
        %v1910 = vpop.f32.mrf.mxu0
        %v1911 = vadd.f32 0.0, %v1910
        %1912 = vmatmul.f32.gmra.mxu0 %v1541
        %v1913 = vpop.f32.mrf.mxu0
        %v1914 = vadd.f32 0.0, %v1913
        %1915 = vmatmul.f32.gmra.mxu0 %v1543
        %v1916 = vpop.f32.mrf.mxu0
        %v1917 = vadd.f32 0.0, %v1916
        %1918 = vmatmul.f32.gmra.mxu0 %v1545
        %v1919 = vpop.f32.mrf.mxu0
        %v1920 = vadd.f32 0.0, %v1919
        %1921 = vmatmul.f32.gmra.mxu0 %v1547
        %v1922 = vpop.f32.mrf.mxu0
        %v1923 = vadd.f32 0.0, %v1922
        %1924 = vmatmul.f32.gmra.mxu0 %v1549
        %v1925 = vpop.f32.mrf.mxu0
        %v1926 = vadd.f32 0.0, %v1925
        %1927 = vmatmul.f32.gmra.mxu0 %v1551
        %v1928 = vpop.f32.mrf.mxu0
        %v1929 = vadd.f32 0.0, %v1928
        %1930 = vdwg.mxu0
        %1931 = vmatpush.msra.mxu0 0.0
        %1932 = vmatpush.msra.mxu0 0.0
        %1933 = vmatpush.msra.mxu0 0.0
        %1934 = vmatpush.msra.mxu0 0.0
        %1935 = vmatpush.msra.mxu0 0.0
        %1936 = vmatpush.msra.mxu0 0.0
        %1937 = vmatpush.msra.mxu0 0.0
        %1938 = vmatpush.msra.mxu0 0.0
        %1939 = vmatpush.msra.mxu0 %v1816
        %1940 = vmatpush.msra.mxu0 %v1814
        %1941 = vmatpush.msra.mxu0 %v1812
        %1942 = vmatpush.msra.mxu0 %v1810
        %1943 = vmatpush.msra.mxu0 %v1808
        %1944 = vmatpush.msra.mxu0 %v1806
        %1945 = vmatpush.msra.mxu0 %v1804
        %1946 = vmatpush.msra.mxu0 %v1802
        %1947 = vmatmul.f32.gmra.mxu0 %v1867
        %v1948 = vpop.f32.mrf.mxu0
        %v1949 = vadd.f32 %v1908, %v1948
        %1950 = vmatmul.f32.gmra.mxu0 %v1870
        %v1951 = vpop.f32.mrf.mxu0
        %v1952 = vadd.f32 %v1911, %v1951
        %1953 = vmatmul.f32.gmra.mxu0 %v1873
        %v1954 = vpop.f32.mrf.mxu0
        %v1955 = vadd.f32 %v1914, %v1954
        %1956 = vmatmul.f32.gmra.mxu0 %v1876
        %v1957 = vpop.f32.mrf.mxu0
        %v1958 = vadd.f32 %v1917, %v1957
        %1959 = vmatmul.f32.gmra.mxu0 %v1879
        %v1960 = vpop.f32.mrf.mxu0
        %v1961 = vadd.f32 %v1920, %v1960
        %1962 = vmatmul.f32.gmra.mxu0 %v1882
        %v1963 = vpop.f32.mrf.mxu0
        %v1964 = vadd.f32 %v1923, %v1963
        %1965 = vmatmul.f32.gmra.mxu0 %v1885
        %v1966 = vpop.f32.mrf.mxu0
        %v1967 = vadd.f32 %v1926, %v1966
        %1968 = vmatmul.f32.gmra.mxu0 %v1888
        %v1969 = vpop.f32.mrf.mxu0
        %v1970 = vadd.f32 %v1929, %v1969
        %1971 = vdwg.mxu0
        %1972 = vmatpush.msra.mxu0 %v1801
        %1973 = vmatpush.msra.mxu0 %v1799
        %1974 = vmatpush.msra.mxu0 %v1797
        %1975 = vmatpush.msra.mxu0 %v1795
        %1976 = vmatpush.msra.mxu0 %v1793
        %1977 = vmatpush.msra.mxu0 %v1791
        %1978 = vmatpush.msra.mxu0 %v1789
        %1979 = vmatpush.msra.mxu0 %v1787
        %1980 = vmatpush.msra.mxu0 %v1785
        %1981 = vmatpush.msra.mxu0 %v1783
        %1982 = vmatpush.msra.mxu0 %v1781
        %1983 = vmatpush.msra.mxu0 %v1779
        %1984 = vmatpush.msra.mxu0 %v1777
        %1985 = vmatpush.msra.mxu0 %v1775
        %1986 = vmatpush.msra.mxu0 %v1773
        %1987 = vmatpush.msra.mxu0 %v1771
        %1988 = vmatmul.f32.gmra.mxu0 %v1537
        %v1989 = vpop.f32.mrf.mxu0
        %v1990 = vadd.f32 0.0, %v1989
        %1991 = vmatmul.f32.gmra.mxu0 %v1539
        %v1992 = vpop.f32.mrf.mxu0
        %v1993 = vadd.f32 0.0, %v1992
        %1994 = vmatmul.f32.gmra.mxu0 %v1541
        %v1995 = vpop.f32.mrf.mxu0
        %v1996 = vadd.f32 0.0, %v1995
        %1997 = vmatmul.f32.gmra.mxu0 %v1543
        %v1998 = vpop.f32.mrf.mxu0
        %v1999 = vadd.f32 0.0, %v1998
        %2000 = vmatmul.f32.gmra.mxu0 %v1545
        %v2001 = vpop.f32.mrf.mxu0
        %v2002 = vadd.f32 0.0, %v2001
        %2003 = vmatmul.f32.gmra.mxu0 %v1547
        %v2004 = vpop.f32.mrf.mxu0
        %v2005 = vadd.f32 0.0, %v2004
        %2006 = vmatmul.f32.gmra.mxu0 %v1549
        %v2007 = vpop.f32.mrf.mxu0
        %v2008 = vadd.f32 0.0, %v2007
        %2009 = vmatmul.f32.gmra.mxu0 %v1551
        %v2010 = vpop.f32.mrf.mxu0
        %v2011 = vadd.f32 0.0, %v2010
        %2012 = vdwg.mxu0
        %2013 = vmatpush.msra.mxu0 0.0
        %2014 = vmatpush.msra.mxu0 0.0
        %2015 = vmatpush.msra.mxu0 0.0
        %2016 = vmatpush.msra.mxu0 0.0
        %2017 = vmatpush.msra.mxu0 0.0
        %2018 = vmatpush.msra.mxu0 0.0
        %2019 = vmatpush.msra.mxu0 0.0
        %2020 = vmatpush.msra.mxu0 0.0
        %2021 = vmatpush.msra.mxu0 %v1817
        %2022 = vmatpush.msra.mxu0 %v1815
        %2023 = vmatpush.msra.mxu0 %v1813
        %2024 = vmatpush.msra.mxu0 %v1811
        %2025 = vmatpush.msra.mxu0 %v1809
        %2026 = vmatpush.msra.mxu0 %v1807
        %2027 = vmatpush.msra.mxu0 %v1805
        %2028 = vmatpush.msra.mxu0 %v1803
        %2029 = vmatmul.f32.gmra.mxu0 %v1867
        %v2030 = vpop.f32.mrf.mxu0
        %v2031 = vadd.f32 %v1990, %v2030
        %2032 = vmatmul.f32.gmra.mxu0 %v1870
        %v2033 = vpop.f32.mrf.mxu0
        %v2034 = vadd.f32 %v1993, %v2033
        %2035 = vmatmul.f32.gmra.mxu0 %v1873
        %v2036 = vpop.f32.mrf.mxu0
        %v2037 = vadd.f32 %v1996, %v2036
        %2038 = vmatmul.f32.gmra.mxu0 %v1876
        %v2039 = vpop.f32.mrf.mxu0
        %v2040 = vadd.f32 %v1999, %v2039
        %2041 = vmatmul.f32.gmra.mxu0 %v1879
        %v2042 = vpop.f32.mrf.mxu0
        %v2043 = vadd.f32 %v2002, %v2042
        %2044 = vmatmul.f32.gmra.mxu0 %v1882
        %v2045 = vpop.f32.mrf.mxu0
        %v2046 = vadd.f32 %v2005, %v2045
        %2047 = vmatmul.f32.gmra.mxu0 %v1885
        %v2048 = vpop.f32.mrf.mxu0
        %v2049 = vadd.f32 %v2008, %v2048
        %2050 = vmatmul.f32.gmra.mxu0 %v1888
        %v2051 = vpop.f32.mrf.mxu0
        %v2052 = vadd.f32 %v2011, %v2051
        %2053 = vdwg.mxu0
        %v2054 = vadd.f32 %v1448, %v1949
        %v2055 = vadd.f32 %v1449, %v2031
        %v2056 = vadd.f32 %v1450, %v1952
        %v2057 = vadd.f32 %v1451, %v2034
        %v2058 = vadd.f32 %v1452, %v1955
        %v2059 = vadd.f32 %v1453, %v2037
        %v2060 = vadd.f32 %v1454, %v1958
        %v2061 = vadd.f32 %v1455, %v2040
        %v2062 = vadd.f32 %v1456, %v1961
        %v2063 = vadd.f32 %v1457, %v2043
        %v2064 = vadd.f32 %v1458, %v1964
        %v2065 = vadd.f32 %v1459, %v2046
        %v2066 = vadd.f32 %v1460, %v1967
        %v2067 = vadd.f32 %v1461, %v2049
        %v2068 = vadd.f32 %v1462, %v1970
        %v2069 = vadd.f32 %v1463, %v2052
        %v2070 = vmul.f32 %v2054, 0.1
        %v2071 = vmul.f32 %v2055, 0.1
        %v2072 = vmul.f32 %v2056, 0.1
        %v2073 = vmul.f32 %v2057, 0.1
        %v2074 = vmul.f32 %v2058, 0.1
        %v2075 = vmul.f32 %v2059, 0.1
        %v2076 = vmul.f32 %v2060, 0.1
        %v2077 = vmul.f32 %v2061, 0.1
        %v2078 = vmul.f32 %v2062, 0.1
        %v2079 = vmul.f32 %v2063, 0.1
        %v2080 = vmul.f32 %v2064, 0.1
        %v2081 = vmul.f32 %v2065, 0.1
        %v2082 = vmul.f32 %v2066, 0.1
        %v2083 = vmul.f32 %v2067, 0.1
        %v2084 = vmul.f32 %v2068, 0.1
        %v2085 = vmul.f32 %v2069, 0.1
        %v2086 = vmax.f32 %v2054, %v2070
        %v2087 = vmax.f32 %v2055, %v2071
        %v2088 = vmax.f32 %v2056, %v2072
        %v2089 = vmax.f32 %v2057, %v2073
        %v2090 = vmax.f32 %v2058, %v2074
        %v2091 = vmax.f32 %v2059, %v2075
        %v2092 = vmax.f32 %v2060, %v2076
        %v2093 = vmax.f32 %v2061, %v2077
        %v2094 = vmax.f32 %v2062, %v2078
        %v2095 = vmax.f32 %v2063, %v2079
        %v2096 = vmax.f32 %v2064, %v2080
        %v2097 = vmax.f32 %v2065, %v2081
        %v2098 = vmax.f32 %v2066, %v2082
        %v2099 = vmax.f32 %v2067, %v2083
        %v2100 = vmax.f32 %v2068, %v2084
        %v2101 = vmax.f32 %v2069, %v2085
        %2102 = vst [vmem:[%s234] sm:$0xff] %v2086
        %2103 = vst [vmem:[%s234 + $0x8] sm:$0xff] %v2087
        %2104 = vst [vmem:[%s234 + $0x10] sm:$0xff] %v2088
        %2105 = vst [vmem:[%s234 + $0x18] sm:$0xff] %v2089
        %2106 = vst [vmem:[%s234 + $0x20] sm:$0xff] %v2090
        %2107 = vst [vmem:[%s234 + $0x28] sm:$0xff] %v2091
        %2108 = vst [vmem:[%s234 + $0x30] sm:$0xff] %v2092
        %2109 = vst [vmem:[%s234 + $0x38] sm:$0xff] %v2093
        %2110 = vst [vmem:[%s234 + $0x40] sm:$0xff] %v2094
        %2111 = vst [vmem:[%s234 + $0x48] sm:$0xff] %v2095
        %2112 = vst [vmem:[%s234 + $0x50] sm:$0xff] %v2096
        %2113 = vst [vmem:[%s234 + $0x58] sm:$0xff] %v2097
        %2114 = vst [vmem:[%s234 + $0x60] sm:$0xff] %v2098
        %2115 = vst [vmem:[%s234 + $0x68] sm:$0xff] %v2099
        %2116 = vst [vmem:[%s234 + $0x70] sm:$0xff] %v2100
        %2117 = vst [vmem:[%s234 + $0x78] sm:$0xff] %v2101
        %s2118 = sand.u32 %s119, 1
        %s2119 = scalar_lea.sflag [#allocation5], %s2118
        %s2120 = sand.u32 %s119, 1
        %s2121 = smul.addr %s2120, 128
        %s2122 = scalar_lea.vmem [#allocation8], %s2121
        // Predicated region
        $region45: #{tpu_custom_call.1} parent=35 // pred_check
          %p2123 = pneg %p129
        $region46: #{tpu_custom_call.1} parent=35 // pred_check_branch
          %2125 = sbr.rel (%p2123) target = $region48
        $region47: #{tpu_custom_call.1} parent=35 // pred_region
          %2127 = vsyncadd %s2119, 0
          %s2128 = smul.addr %s22, 16
          %s2129 = smul.addr %s2128, 8
          %s2130 = scalar_lea.hbm %s4, %s2129
          %s2131 = sshll.u32 %s2122, 4
          %s2132 = int_to_ptr.vmem [resolvable:$true] %s2131
          %s2133 = sshll.u32 %s2130, 4
          %s2134 = int_to_ptr.hbm [resolvable:$true] %s2133
          %2139 = dma.vmem_to_hbm [thread:$0]  %s2132, 2048, %s2134, %s2119, 256, 256, 16
        $region48: #{tpu_custom_call.1} parent=35 // pred_fallthru
          _
      $region36: #{tpu_custom_call.1} parent=5 // pred_fallthru
        _
      %p2140 = scmp.le.s32.totalorder 2, %s17
      // Predicated region
      $region49: #{tpu_custom_call.1} parent=5 // pred_check
        %p2141 = pneg %p2140
      $region50: #{tpu_custom_call.1} parent=5 // pred_check_branch
        %2143 = sbr.rel (%p2141) target = $region52
      $region51: #{tpu_custom_call.1} parent=5 // pred_region
        %s2144 = ssub.s32 %s17, 2
        // Predicated region
        $region53: #{tpu_custom_call.1} parent=51 // pred_check
          %p2145 = pneg %p135
        $region54: #{tpu_custom_call.1} parent=51 // pred_check_branch
          %2147 = sbr.rel (%p2145) target = $region56
        $region55: #{tpu_custom_call.1} parent=51 // pred_region
          %s2148 = sand.u32 %s120, 1
          %s2149 = scalar_lea.sflag [#allocation5], %s2148
          %s2150 = sand.u32 %s120, 1
          %s2151 = smul.addr %s2150, 128
          %s2152 = scalar_lea.vmem [#allocation8], %s2151
          %2154 = dma.done %s2149, 2048
        $region56: #{tpu_custom_call.1} parent=51 // pred_fallthru
          _
      $region52: #{tpu_custom_call.1} parent=5 // pred_fallthru
        _
    $region6: #{tpu_custom_call.1} parent=1 // loop_footer
      %s21 = sadd.s32 1, %s17
    $region7: #{tpu_custom_call.1} parent=1 // loop_footer_branch
      %16 = sbr.rel target = $region3
    $region8: #{tpu_custom_call.1} parent=1 // loop_exit
      _
    %2155 = vsyncpa [#allocation4], 1
    %s2156 = scalar_lea.sflag [#allocation4], 1
    %2157 = vsyncpa %s2156, 1
    %2158 = vsyncpa [#allocation7], 1
    %2159 = vsyncpa [#allocation5], 1
    %s2160 = scalar_lea.sflag [#allocation5], 1
    %2161 = vsyncpa %s2160, 1

</llo_original>
